<compile_context>
chip_gen: v6e
topology: v6e:2x2x1
jax: 0.10.0
libtpu: 0.0.40
codegen_flags: <defaults>
</compile_context>

<pallas_src>
import jax
import jax.numpy as jnp
from jax import lax
from jax.experimental import pallas as pl
from jax.experimental.pallas import tpu as pltpu


def _residual_block_kernel(xt_ref, x_ref, xb_ref, w1_ref, sb1_ref, w2_ref,
                           sb2_ref, o_ref):
    """One (image, row-band) per grid step. Block shapes:
       xt/xb: (1, 1, W, C) halo rows, x: (1, TH, W, C), o: (1, TH, W, C)."""
    TH, W, C = x_ref.shape[1], x_ref.shape[2], x_ref.shape[3]
    C2 = w1_ref.shape[1]
    cdt = w1_ref.dtype                       # matmul compute dtype (bf16 / f32)

    j = pl.program_id(1)
    nj = pl.num_programs(1)

    x_band = x_ref[0]                        # (TH, W, C) f32

    # ---- layer_1 (1x1 conv == channel matmul) over band + 1-row halos -------
    xrows = jnp.concatenate([xt_ref[0], x_band, xb_ref[0]], axis=0)  # (TH+2,W,C)
    xf = xrows.reshape((TH + 2) * W, C).astype(cdt)
    h = jnp.dot(xf, w1_ref[...], preferred_element_type=jnp.float32)  # (.,C2) f32
    h = h * sb1_ref[0] + sb1_ref[1]                                   # folded BN
    h = jnp.where(h > 0, h, 0.1 * h)                                  # LeakyReLU
    h = h.reshape(TH + 2, W, C2)

    # Halo rows outside the image must be zero (the 3x3 conv's zero padding
    # applies to the layer_1 output, not to x).
    row = lax.broadcasted_iota(jnp.int32, (TH + 2, 1, 1), 0)
    valid = jnp.logical_and(jnp.logical_or(row > 0, j > 0),
                            jnp.logical_or(row < TH + 1, j < nj - 1))
    h = jnp.where(valid, h, 0.0).astype(cdt)

    # ---- column shifts for the 3x3 taps via XLU roll (no misaligned slices) -
    col = lax.broadcasted_iota(jnp.int32, (1, W, 1), 1)
    zero = jnp.zeros((), cdt)
    h_l = jnp.where(col > 0, pltpu.roll(h, shift=1, axis=1), zero)      # h[c-1]
    h_r = jnp.where(col < W - 1, pltpu.roll(h, shift=W - 1, axis=1), zero)  # h[c+1]
    shifted = (h_l, h, h_r)                                             # dj=0,1,2

    # ---- layer_2: 3x3 conv as ONE K = 9*C2 matmul (im2col on the lane axis) -
    taps = [shifted[dj][di:di + TH].reshape(TH * W, C2)
            for di in range(3) for dj in range(3)]
    patch = jnp.concatenate(taps, axis=-1)                              # (TH*W, 9*C2)
    acc = jnp.dot(patch, w2_ref[...], preferred_element_type=jnp.float32)
    acc = acc * sb2_ref[0] + sb2_ref[1]                                 # folded BN
    acc = jnp.where(acc > 0, acc, 0.1 * acc)                            # LeakyReLU

    # ---- residual add (f32) and store ---------------------------------------
    out = acc + x_band.astype(jnp.float32).reshape(TH * W, C)
    o_ref[0] = out.reshape(TH, W, C).astype(o_ref.dtype)


def residual_block_pallas(x_nchw, w1, sb1, w2f, sb2, *, tile_h=8,
                          compute_dtype=jnp.bfloat16):
    """x_nchw: (N, C, H, W) float32.  Returns (N, C, H, W) float32."""
    x = jnp.transpose(x_nchw, (0, 2, 3, 1)).astype(jnp.float32)     # -> NHWC
    N, H, W, C = x.shape
    C2 = w1.shape[1]

    # Row-band height: largest value <= tile_h that divides H.
    th = max(1, min(int(tile_h), H))
    while H % th:
        th -= 1
    nbands = H // th

    # MXU operands in the (possibly reduced-precision) compute dtype.
    w1c = w1.astype(compute_dtype)
    w2c = w2f.astype(compute_dtype)
    sb1f = sb1.astype(jnp.float32)
    sb2f = sb2.astype(jnp.float32)

    # Advisory cost estimate so XLA schedules the surrounding transposes well.
    flops = 2 * N * H * W * (C * C2 + 9 * C2 * C)
    bytes_accessed = int(
        (2 * x.size + 2 * N * nbands * W * C) * 4
        + w1c.size * w1c.dtype.itemsize + w2c.size * w2c.dtype.itemsize
        + (sb1f.size + sb2f.size) * 4)
    cost = pl.CostEstimate(flops=flops, transcendentals=0,
                           bytes_accessed=bytes_accessed)

    out = pl.pallas_call(
        _residual_block_kernel,
        out_shape=jax.ShapeDtypeStruct((N, H, W, C), jnp.float32),
        grid_spec=pltpu.PrefetchScalarGridSpec(
            num_scalar_prefetch=0,
            grid=(N, nbands),
            in_specs=[
                # top halo row (clamped at the border; zeroed in-kernel there)
                pl.BlockSpec((1, 1, W, C),
                             lambda n, j: (n, jnp.maximum(j * th - 1, 0), 0, 0)),
                # the row band itself
                pl.BlockSpec((1, th, W, C), lambda n, j: (n, j, 0, 0)),
                # bottom halo row (clamped at the border; zeroed in-kernel there)
                pl.BlockSpec((1, 1, W, C),
                             lambda n, j: (n, jnp.minimum((j + 1) * th, H - 1), 0, 0)),
                # weights / folded BN scale+bias, broadcast to every grid step
                pl.BlockSpec((C, C2), lambda n, j: (0, 0)),
                pl.BlockSpec((2, 1, C2), lambda n, j: (0, 0, 0)),
                pl.BlockSpec((9 * C2, C), lambda n, j: (0, 0)),
                pl.BlockSpec((2, 1, C), lambda n, j: (0, 0, 0)),
            ],
            out_specs=pl.BlockSpec((1, th, W, C), lambda n, j: (n, j, 0, 0)),
        ),
        compiler_params=pltpu.CompilerParams(
            dimension_semantics=("parallel", "parallel"),
            vmem_limit_bytes=48 * 1024 * 1024,
        ),
        cost_estimate=cost,
    )(x, x, x, w1c, sb1f, w2c, sb2f)

    return jnp.transpose(out, (0, 3, 1, 2))                          # -> NCHW


# ----------------------------------------------------------------------------
# Parameter construction (deterministic) and a pure-JAX NCHW reference.
# ----------------------------------------------------------------------------
def make_params(key, C):
    C2 = C // 2
    ks = jax.random.split(key, 12)
    return {
        # layer_1 : Conv2d(C, C2, k=1), BN(C2)
        "conv1_w": jax.random.normal(ks[0], (C2, C, 1, 1), jnp.float32) * 0.2,
        "conv1_b": jax.random.normal(ks[1], (C2,), jnp.float32) * 0.1,
        "bn1_gamma": jax.random.uniform(ks[2], (C2,), jnp.float32, 0.5, 1.5),
        "bn1_beta": jax.random.normal(ks[3], (C2,), jnp.float32) * 0.1,
        "bn1_mean": jax.random.normal(ks[4], (C2,), jnp.float32) * 0.1,
        "bn1_var": jax.random.uniform(ks[5], (C2,), jnp.float32, 0.5, 1.5),
        # layer_2 : Conv2d(C2, C, k=3, p=1), BN(C)
        "conv2_w": jax.random.normal(ks[6], (C, C2, 3, 3), jnp.float32) * 0.2,
        "conv2_b": jax.random.normal(ks[7], (C,), jnp.float32) * 0.1,
        "bn2_gamma": jax.random.uniform(ks[8], (C,), jnp.float32, 0.5, 1.5),
        "bn2_beta": jax.random.normal(ks[9], (C,), jnp.float32) * 0.1,
        "bn2_mean": jax.random.normal(ks[10], (C,), jnp.float32) * 0.1,
        "bn2_var": jax.random.uniform(ks[11], (C,), jnp.float32, 0.5, 1.5),
    }


def fold_params(p, eps=1e-5):
    """Fold conv bias + BN (eval mode) into per-channel scale/bias; repack weights."""
    # layer_1
    s1 = p["bn1_gamma"] / jnp.sqrt(p["bn1_var"] + eps)
    b1 = p["bn1_beta"] - p["bn1_mean"] * s1 + p["conv1_b"] * s1
    w1 = jnp.transpose(p["conv1_w"][:, :, 0, 0], (1, 0))             # (C, C2)
    sb1 = jnp.stack([s1[None, :], b1[None, :]], axis=0)              # (2, 1, C2)
    # layer_2 : (kh, kw, C2, C) flattened to (9*C2, C) in (di, dj, c2) order,
    # matching the kernel's im2col channel ordering.
    s2 = p["bn2_gamma"] / jnp.sqrt(p["bn2_var"] + eps)
    b2 = p["bn2_beta"] - p["bn2_mean"] * s2 + p["conv2_b"] * s2
    C, C2 = p["conv2_w"].shape[0], p["conv2_w"].shape[1]
    w2f = jnp.transpose(p["conv2_w"], (2, 3, 1, 0)).reshape(9 * C2, C)
    sb2 = jnp.stack([s2[None, :], b2[None, :]], axis=0)              # (2, 1, C)
    return w1, sb1, w2f, sb2


def residual_block_ref(x, p, eps=1e-5):
    """Pure-JAX NCHW reference matching the PyTorch module in eval mode."""
    dn = ("NCHW", "OIHW", "NCHW")

    def cbl(x, w, b, gamma, beta, mean, var, pad):
        y = lax.conv_general_dilated(x, w, (1, 1), ((pad, pad), (pad, pad)),
                                     dimension_numbers=dn)
        y = y + b[None, :, None, None]
        y = (y - mean[None, :, None, None]) / jnp.sqrt(var[None, :, None, None] + eps)
        y = y * gamma[None, :, None, None] + beta[None, :, None, None]
        return jnp.where(y > 0, y, 0.1 * y)

    h = cbl(x, p["conv1_w"], p["conv1_b"], p["bn1_gamma"], p["bn1_beta"],
            p["bn1_mean"], p["bn1_var"], pad=0)
    h = cbl(h, p["conv2_w"], p["conv2_b"], p["bn2_gamma"], p["bn2_beta"],
            p["bn2_mean"], p["bn2_var"], pad=1)
    return h + x


if __name__ == "__main__":
    N, C, H, W = 2, 4, 16, 16
    key = jax.random.PRNGKey(0)
    kx, kp = jax.random.split(key)

    x = jax.random.normal(kx, (N, C, H, W), jnp.float32)
    params = make_params(kp, C)
    w1, sb1, w2f, sb2 = fold_params(params)

    ref = jax.block_until_ready(residual_block_ref(x, params))

    # Exact-semantics check (f32 matmuls): validates tiling/halo correctness.
    out_f32 = jax.block_until_ready(
        residual_block_pallas(x, w1, sb1, w2f, sb2, compute_dtype=jnp.float32))
    assert out_f32.shape == (N, C, H, W)
    err32 = jnp.max(jnp.abs(out_f32 - ref))
    assert jnp.allclose(out_f32, ref, atol=1e-4, rtol=1e-4), (
        f"f32 path max abs err {err32}")

    # Fast path: bf16 MXU operands with f32 accumulation.
    out_bf16 = jax.block_until_ready(
        residual_block_pallas(x, w1, sb1, w2f, sb2, compute_dtype=jnp.bfloat16))
    errbf = jnp.max(jnp.abs(out_bf16 - ref))
    assert jnp.allclose(out_bf16, ref, atol=5e-2, rtol=5e-2), (
        f"bf16 path max abs err {errbf}")

    print("KERNEL_OK")
</pallas_src>

<mosaic_0001>
module attributes {stable_mosaic.version = 11 : i64} {
  func.func @_residual_block_kernel(%arg0: i32, %arg1: i32, %arg2: memref<1x1x16x4xf32, #tpu.memory_space<vmem>>, %arg3: memref<1x8x16x4xf32, #tpu.memory_space<vmem>>, %arg4: memref<1x1x16x4xf32, #tpu.memory_space<vmem>>, %arg5: memref<4x2xf32, #tpu.memory_space<vmem>>, %arg6: memref<2x1x2xf32, #tpu.memory_space<vmem>>, %arg7: memref<18x4xf32, #tpu.memory_space<vmem>>, %arg8: memref<2x1x4xf32, #tpu.memory_space<vmem>>, %arg9: memref<1x8x16x4xf32, #tpu.memory_space<vmem>>) attributes {dimension_semantics = [#tpu.dimension_semantics<parallel>, #tpu.dimension_semantics<parallel>], iteration_bounds = array<i64: 2, 2>, scalar_prefetch = 0 : i64, scratch_operands = 0 : i64, tpu.core_type = #tpu.core_type<tc>, window_params = [{transform_indices = @transform_0, window_bounds = array<i64: 1, 1, 16, 4>}, {transform_indices = @transform_1, window_bounds = array<i64: 1, 8, 16, 4>}, {transform_indices = @transform_2, window_bounds = array<i64: 1, 1, 16, 4>}, {pipeline_mode = #tpu.pipeline_mode<synchronous>, transform_indices = @transform_3, window_bounds = array<i64: 4, 2>}, {pipeline_mode = #tpu.pipeline_mode<synchronous>, transform_indices = @transform_4, window_bounds = array<i64: 2, 1, 2>}, {pipeline_mode = #tpu.pipeline_mode<synchronous>, transform_indices = @transform_5, window_bounds = array<i64: 18, 4>}, {pipeline_mode = #tpu.pipeline_mode<synchronous>, transform_indices = @transform_6, window_bounds = array<i64: 2, 1, 4>}, {transform_indices = @transform_7, window_bounds = array<i64: 1, 8, 16, 4>}]} {
    %c0 = arith.constant 0 : index
    %c0_0 = arith.constant 0 : index
    %c0_1 = arith.constant 0 : index
    %c0_2 = arith.constant 0 : index
    %0 = vector.load %arg3[%c0, %c0_0, %c0_1, %c0_2] : memref<1x8x16x4xf32, #tpu.memory_space<vmem>>, vector<1x8x16x4xf32>
    %1 = vector.shape_cast %0 : vector<1x8x16x4xf32> to vector<8x16x4xf32>
    %c0_3 = arith.constant 0 : index
    %c0_4 = arith.constant 0 : index
    %c0_5 = arith.constant 0 : index
    %c0_6 = arith.constant 0 : index
    %2 = vector.load %arg2[%c0_3, %c0_4, %c0_5, %c0_6] : memref<1x1x16x4xf32, #tpu.memory_space<vmem>>, vector<1x1x16x4xf32>
    %3 = vector.shape_cast %2 : vector<1x1x16x4xf32> to vector<1x16x4xf32>
    %c0_7 = arith.constant 0 : index
    %c0_8 = arith.constant 0 : index
    %c0_9 = arith.constant 0 : index
    %c0_10 = arith.constant 0 : index
    %4 = vector.load %arg4[%c0_7, %c0_8, %c0_9, %c0_10] : memref<1x1x16x4xf32, #tpu.memory_space<vmem>>, vector<1x1x16x4xf32>
    %5 = vector.shape_cast %4 : vector<1x1x16x4xf32> to vector<1x16x4xf32>
    %6 = tpu.concatenate %3, %1, %5 in 0 : vector<1x16x4xf32>, vector<8x16x4xf32>, vector<1x16x4xf32> -> vector<10x16x4xf32>
    %7 = vector.shape_cast %6 : vector<10x16x4xf32> to vector<160x4xf32>
    %c0_11 = arith.constant 0 : index
    %c0_12 = arith.constant 0 : index
    %8 = vector.load %arg5[%c0_11, %c0_12] : memref<4x2xf32, #tpu.memory_space<vmem>>, vector<4x2xf32>
    %cst = arith.constant dense<0.000000e+00> : vector<160x2xf32>
    %9 = tpu.matmul %7, %8, %cst {dimension_numbers = #tpu.dot_dimension_numbers<[1], [0], [0], [1], [0, 0, 1, 1], [], []>} : vector<160x4xf32>, vector<4x2xf32>, vector<160x2xf32> -> vector<160x2xf32>
    %c0_13 = arith.constant 0 : index
    %c0_14 = arith.constant 0 : index
    %c0_15 = arith.constant 0 : index
    %10 = vector.load %arg6[%c0_13, %c0_14, %c0_15] : memref<2x1x2xf32, #tpu.memory_space<vmem>>, vector<1x1x2xf32>
    %11 = vector.shape_cast %10 : vector<1x1x2xf32> to vector<1x2xf32>
    %12 = vector.broadcast %11 : vector<1x2xf32> to vector<160x2xf32>
    %13 = arith.mulf %9, %12 : vector<160x2xf32>
    %c1 = arith.constant 1 : index
    %c0_16 = arith.constant 0 : index
    %c0_17 = arith.constant 0 : index
    %14 = vector.load %arg6[%c1, %c0_16, %c0_17] : memref<2x1x2xf32, #tpu.memory_space<vmem>>, vector<1x1x2xf32>
    %15 = vector.shape_cast %14 : vector<1x1x2xf32> to vector<1x2xf32>
    %16 = vector.broadcast %15 : vector<1x2xf32> to vector<160x2xf32>
    %17 = arith.addf %13, %16 : vector<160x2xf32>
    %cst_18 = arith.constant 0.000000e+00 : f32
    %18 = vector.broadcast %cst_18 : f32 to vector<160x2xf32>
    %19 = arith.cmpf ogt, %17, %18 : vector<160x2xf32>
    %cst_19 = arith.constant 1.000000e-01 : f32
    %20 = vector.broadcast %cst_19 : f32 to vector<160x2xf32>
    %21 = arith.mulf %20, %17 : vector<160x2xf32>
    %22 = arith.select %19, %17, %21 : vector<160x2xi1>, vector<160x2xf32>
    %23 = vector.shape_cast %22 : vector<160x2xf32> to vector<10x16x2xf32>
    %24 = tpu.iota {dimensions = array<i32: 0>} : vector<10x1x1xi32>
    %c0_i32 = arith.constant 0 : i32
    %25 = vector.broadcast %c0_i32 : i32 to vector<10x1x1xi32>
    %26 = arith.cmpi sgt, %24, %25 : vector<10x1x1xi32>
    %c0_i32_20 = arith.constant 0 : i32
    %27 = arith.cmpi sgt, %arg1, %c0_i32_20 : i32
    %28 = vector.broadcast %27 : i1 to vector<10x1x1xi1>
    %29 = arith.ori %26, %28 : vector<10x1x1xi1>
    %c9_i32 = arith.constant 9 : i32
    %30 = vector.broadcast %c9_i32 : i32 to vector<10x1x1xi32>
    %31 = arith.cmpi slt, %24, %30 : vector<10x1x1xi32>
    %c1_i32 = arith.constant 1 : i32
    %32 = arith.cmpi slt, %arg1, %c1_i32 : i32
    %33 = vector.broadcast %32 : i1 to vector<10x1x1xi1>
    %34 = arith.ori %31, %33 : vector<10x1x1xi1>
    %35 = arith.andi %29, %34 : vector<10x1x1xi1>
    %cst_21 = arith.constant 0.000000e+00 : f32
    %36 = vector.shape_cast %35 : vector<10x1x1xi1> to vector<10x1x1xi1>
    %37 = vector.broadcast %36 : vector<10x1x1xi1> to vector<10x16x2xi1>
    %38 = vector.broadcast %cst_21 : f32 to vector<10x16x2xf32>
    %39 = arith.select %37, %23, %38 : vector<10x16x2xi1>, vector<10x16x2xf32>
    %40 = tpu.iota {dimensions = array<i32: 1>} : vector<1x16x1xi32>
    %c0_i32_22 = arith.constant 0 : i32
    %41 = vector.broadcast %c0_i32_22 : i32 to vector<1x16x1xi32>
    %42 = arith.cmpi sgt, %40, %41 : vector<1x16x1xi32>
    %c1_i32_23 = arith.constant 1 : i32
    %43 = tpu.dynamic_rotate %39 by %c1_i32_23 dim 1 : vector<10x16x2xf32>, i32 -> vector<10x16x2xf32>
    %cst_24 = arith.constant 0.000000e+00 : f32
    %44 = vector.shape_cast %42 : vector<1x16x1xi1> to vector<1x16x1xi1>
    %45 = vector.broadcast %44 : vector<1x16x1xi1> to vector<10x16x2xi1>
    %46 = vector.broadcast %cst_24 : f32 to vector<10x16x2xf32>
    %47 = arith.select %45, %43, %46 : vector<10x16x2xi1>, vector<10x16x2xf32>
    %c15_i32 = arith.constant 15 : i32
    %48 = vector.broadcast %c15_i32 : i32 to vector<1x16x1xi32>
    %49 = arith.cmpi slt, %40, %48 : vector<1x16x1xi32>
    %c15_i32_25 = arith.constant 15 : i32
    %50 = tpu.dynamic_rotate %39 by %c15_i32_25 dim 1 : vector<10x16x2xf32>, i32 -> vector<10x16x2xf32>
    %cst_26 = arith.constant 0.000000e+00 : f32
    %51 = vector.shape_cast %49 : vector<1x16x1xi1> to vector<1x16x1xi1>
    %52 = vector.broadcast %51 : vector<1x16x1xi1> to vector<10x16x2xi1>
    %53 = vector.broadcast %cst_26 : f32 to vector<10x16x2xf32>
    %54 = arith.select %52, %50, %53 : vector<10x16x2xi1>, vector<10x16x2xf32>
    %55 = vector.extract_strided_slice %47 {offsets = [0, 0, 0], sizes = [8, 16, 2], strides = [1, 1, 1]} : vector<10x16x2xf32> to vector<8x16x2xf32>
    %56 = vector.shape_cast %55 : vector<8x16x2xf32> to vector<128x2xf32>
    %57 = vector.extract_strided_slice %39 {offsets = [0, 0, 0], sizes = [8, 16, 2], strides = [1, 1, 1]} : vector<10x16x2xf32> to vector<8x16x2xf32>
    %58 = vector.shape_cast %57 : vector<8x16x2xf32> to vector<128x2xf32>
    %59 = vector.extract_strided_slice %54 {offsets = [0, 0, 0], sizes = [8, 16, 2], strides = [1, 1, 1]} : vector<10x16x2xf32> to vector<8x16x2xf32>
    %60 = vector.shape_cast %59 : vector<8x16x2xf32> to vector<128x2xf32>
    %61 = vector.extract_strided_slice %47 {offsets = [1, 0, 0], sizes = [8, 16, 2], strides = [1, 1, 1]} : vector<10x16x2xf32> to vector<8x16x2xf32>
    %62 = vector.shape_cast %61 : vector<8x16x2xf32> to vector<128x2xf32>
    %63 = vector.extract_strided_slice %39 {offsets = [1, 0, 0], sizes = [8, 16, 2], strides = [1, 1, 1]} : vector<10x16x2xf32> to vector<8x16x2xf32>
    %64 = vector.shape_cast %63 : vector<8x16x2xf32> to vector<128x2xf32>
    %65 = vector.extract_strided_slice %54 {offsets = [1, 0, 0], sizes = [8, 16, 2], strides = [1, 1, 1]} : vector<10x16x2xf32> to vector<8x16x2xf32>
    %66 = vector.shape_cast %65 : vector<8x16x2xf32> to vector<128x2xf32>
    %67 = vector.extract_strided_slice %47 {offsets = [2, 0, 0], sizes = [8, 16, 2], strides = [1, 1, 1]} : vector<10x16x2xf32> to vector<8x16x2xf32>
    %68 = vector.shape_cast %67 : vector<8x16x2xf32> to vector<128x2xf32>
    %69 = vector.extract_strided_slice %39 {offsets = [2, 0, 0], sizes = [8, 16, 2], strides = [1, 1, 1]} : vector<10x16x2xf32> to vector<8x16x2xf32>
    %70 = vector.shape_cast %69 : vector<8x16x2xf32> to vector<128x2xf32>
    %71 = vector.extract_strided_slice %54 {offsets = [2, 0, 0], sizes = [8, 16, 2], strides = [1, 1, 1]} : vector<10x16x2xf32> to vector<8x16x2xf32>
    %72 = vector.shape_cast %71 : vector<8x16x2xf32> to vector<128x2xf32>
    %73 = tpu.concatenate %56, %58, %60, %62, %64, %66, %68, %70, %72 in 1 : vector<128x2xf32>, vector<128x2xf32>, vector<128x2xf32>, vector<128x2xf32>, vector<128x2xf32>, vector<128x2xf32>, vector<128x2xf32>, vector<128x2xf32>, vector<128x2xf32> -> vector<128x18xf32>
    %c0_27 = arith.constant 0 : index
    %c0_28 = arith.constant 0 : index
    %74 = vector.load %arg7[%c0_27, %c0_28] : memref<18x4xf32, #tpu.memory_space<vmem>>, vector<18x4xf32>
    %cst_29 = arith.constant dense<0.000000e+00> : vector<128x4xf32>
    %75 = tpu.matmul %73, %74, %cst_29 {dimension_numbers = #tpu.dot_dimension_numbers<[1], [0], [0], [1], [0, 0, 1, 1], [], []>} : vector<128x18xf32>, vector<18x4xf32>, vector<128x4xf32> -> vector<128x4xf32>
    %c0_30 = arith.constant 0 : index
    %c0_31 = arith.constant 0 : index
    %c0_32 = arith.constant 0 : index
    %76 = vector.load %arg8[%c0_30, %c0_31, %c0_32] : memref<2x1x4xf32, #tpu.memory_space<vmem>>, vector<1x1x4xf32>
    %77 = vector.shape_cast %76 : vector<1x1x4xf32> to vector<1x4xf32>
    %78 = vector.broadcast %77 : vector<1x4xf32> to vector<128x4xf32>
    %79 = arith.mulf %75, %78 : vector<128x4xf32>
    %c1_33 = arith.constant 1 : index
    %c0_34 = arith.constant 0 : index
    %c0_35 = arith.constant 0 : index
    %80 = vector.load %arg8[%c1_33, %c0_34, %c0_35] : memref<2x1x4xf32, #tpu.memory_space<vmem>>, vector<1x1x4xf32>
    %81 = vector.shape_cast %80 : vector<1x1x4xf32> to vector<1x4xf32>
    %82 = vector.broadcast %81 : vector<1x4xf32> to vector<128x4xf32>
    %83 = arith.addf %79, %82 : vector<128x4xf32>
    %cst_36 = arith.constant 0.000000e+00 : f32
    %84 = vector.broadcast %cst_36 : f32 to vector<128x4xf32>
    %85 = arith.cmpf ogt, %83, %84 : vector<128x4xf32>
    %cst_37 = arith.constant 1.000000e-01 : f32
    %86 = vector.broadcast %cst_37 : f32 to vector<128x4xf32>
    %87 = arith.mulf %86, %83 : vector<128x4xf32>
    %88 = arith.select %85, %83, %87 : vector<128x4xi1>, vector<128x4xf32>
    %89 = vector.shape_cast %1 : vector<8x16x4xf32> to vector<128x4xf32>
    %90 = arith.addf %88, %89 : vector<128x4xf32>
    %91 = vector.shape_cast %90 : vector<128x4xf32> to vector<8x16x4xf32>
    %c0_38 = arith.constant 0 : index
    %c0_39 = arith.constant 0 : index
    %c0_40 = arith.constant 0 : index
    %c0_41 = arith.constant 0 : index
    %92 = vector.load %arg9[%c0_38, %c0_39, %c0_40, %c0_41] : memref<1x8x16x4xf32, #tpu.memory_space<vmem>>, vector<1x8x16x4xf32>
    %93 = vector.shape_cast %92 : vector<1x8x16x4xf32> to vector<8x16x4xf32>
    %94 = vector.shape_cast %91 : vector<8x16x4xf32> to vector<1x8x16x4xf32>
    tpu.vector_store %arg9[%c0_38, %c0_39, %c0_40, %c0_41], %94 {strides = array<i32>} : memref<1x8x16x4xf32, #tpu.memory_space<vmem>>, vector<1x8x16x4xf32>,
    return
  }
  func.func @transform_0(%arg0: i32, %arg1: i32) -> (i32, i32, i32, i32) {
    %c8_i32 = arith.constant 8 : i32
    %0 = arith.muli %arg1, %c8_i32 : i32
    %c1_i32 = arith.constant 1 : i32
    %1 = arith.subi %0, %c1_i32 : i32
    %c0_i32 = arith.constant 0 : i32
    %2 = arith.maxsi %1, %c0_i32 : i32
    %c0_i32_0 = arith.constant 0 : i32
    %c0_i32_1 = arith.constant 0 : i32
    %c0_i32_2 = arith.constant 0 : i32
    return %arg0, %2, %c0_i32_0, %c0_i32_1 : i32, i32, i32, i32
  }
  func.func @transform_1(%arg0: i32, %arg1: i32) -> (i32, i32, i32, i32) {
    %c0_i32 = arith.constant 0 : i32
    %c0_i32_0 = arith.constant 0 : i32
    %c0_i32_1 = arith.constant 0 : i32
    return %arg0, %arg1, %c0_i32, %c0_i32_0 : i32, i32, i32, i32
  }
  func.func @transform_2(%arg0: i32, %arg1: i32) -> (i32, i32, i32, i32) {
    %c1_i32 = arith.constant 1 : i32
    %0 = arith.addi %arg1, %c1_i32 : i32
    %c8_i32 = arith.constant 8 : i32
    %1 = arith.muli %0, %c8_i32 : i32
    %c15_i32 = arith.constant 15 : i32
    %2 = arith.minsi %1, %c15_i32 : i32
    %c0_i32 = arith.constant 0 : i32
    %c0_i32_0 = arith.constant 0 : i32
    %c0_i32_1 = arith.constant 0 : i32
    return %arg0, %2, %c0_i32, %c0_i32_0 : i32, i32, i32, i32
  }
  func.func @transform_3(%arg0: i32, %arg1: i32) -> (i32, i32) {
    %c0_i32 = arith.constant 0 : i32
    %c0_i32_0 = arith.constant 0 : i32
    %c0_i32_1 = arith.constant 0 : i32
    return %c0_i32, %c0_i32_0 : i32, i32
  }
  func.func @transform_4(%arg0: i32, %arg1: i32) -> (i32, i32, i32) {
    %c0_i32 = arith.constant 0 : i32
    %c0_i32_0 = arith.constant 0 : i32
    %c0_i32_1 = arith.constant 0 : i32
    %c0_i32_2 = arith.constant 0 : i32
    return %c0_i32, %c0_i32_0, %c0_i32_1 : i32, i32, i32
  }
  func.func @transform_5(%arg0: i32, %arg1: i32) -> (i32, i32) {
    %c0_i32 = arith.constant 0 : i32
    %c0_i32_0 = arith.constant 0 : i32
    %c0_i32_1 = arith.constant 0 : i32
    return %c0_i32, %c0_i32_0 : i32, i32
  }
  func.func @transform_6(%arg0: i32, %arg1: i32) -> (i32, i32, i32) {
    %c0_i32 = arith.constant 0 : i32
    %c0_i32_0 = arith.constant 0 : i32
    %c0_i32_1 = arith.constant 0 : i32
    %c0_i32_2 = arith.constant 0 : i32
    return %c0_i32, %c0_i32_0, %c0_i32_1 : i32, i32, i32
  }
  func.func @transform_7(%arg0: i32, %arg1: i32) -> (i32, i32, i32, i32) {
    %c0_i32 = arith.constant 0 : i32
    %c0_i32_0 = arith.constant 0 : i32
    %c0_i32_1 = arith.constant 0 : i32
    return %arg0, %arg1, %c0_i32, %c0_i32_0 : i32, i32, i32, i32
  }
}

</mosaic_0001>

<llo_original>
// kernel: tpu_custom_call.1
$region0: #{tpu_custom_call.1}
  #allocation0 [shape = 'u32[]', space=smem, size = 0x4, offset = 0x4, fixed_abs, tag = 'smem constant byte address 0x4 - core index']
  #allocation1 [shape = 'u32[144,128]{1,0:T(1,128)}', space=vmem, size = 0x12000, scoped, tag = 'internal scratch']
  %s0 = inlined_call_operand.vmem [shape: f32[2,16,16,4], index: 0, kind: input, shape index: {}]
  %s1 = inlined_call_operand.vmem [shape: f32[2,16,16,4], index: 1, kind: input, shape index: {}]
  %s2 = inlined_call_operand.vmem [shape: f32[2,16,16,4], index: 2, kind: input, shape index: {}]
  %s3 = inlined_call_operand.vmem [shape: f32[4,2], index: 3, kind: input, shape index: {}]
  %s4 = inlined_call_operand.vmem [shape: f32[2,1,2], index: 4, kind: input, shape index: {}]
  %s5 = inlined_call_operand.vmem [shape: f32[18,4], index: 5, kind: input, shape index: {}]
  %s6 = inlined_call_operand.vmem [shape: f32[2,1,4], index: 6, kind: input, shape index: {}]
  %s7 = inlined_call_operand.vmem [shape: f32[2,16,16,4], index: 7, kind: output, shape index: {}]
  %s8 = sld [smem:[#allocation0]]
  $region61: #{tpu_custom_call.1} parent=0
    _
  %s10 = ssub.s32 1, %s8
  %s11 = scalar_select 0, %s10, %s8
  loop: start=0, step=1, limit=6
  $region2: #{tpu_custom_call.1} parent=0 // loop_pre_header
    _
  $region3: #{tpu_custom_call.1} parent=0 // loop_header
    %s13 = sphi 0, %s17
    %p14 = scmp.ge.s32.totalorder %s13, 6
    %s20 = sphi 0, %s32
    %s21 = sphi 0, %s28
    %s22 = sphi 0, %s20
    %s23 = sphi 0, %s21
    %s24 = sphi 0, %s22
    %s25 = sphi 0, %s23
    %s45 = sphi 0, %s47
    %s48 = sphi 0, %s45
    %s49 = sphi 0, %s48
    %s65 = sphi 0, %s49
    %s73 = sphi 0, %s75
    %s76 = sphi 0, %s73
    %s77 = sphi 0, %s76
    %s93 = sphi 0, %s77
    %s109 = sphi 0, %s111
    %s112 = sphi 0, %s109
    %s113 = sphi 0, %s112
    %s129 = sphi 0, %s113
    %s133 = sphi 0, %s133
    %s135 = sphi 0, %s133
    %s136 = sphi 0, %s135
    %s150 = sphi 0, %s136
    %s154 = sphi 0, %s154
    %s156 = sphi 0, %s154
    %s157 = sphi 0, %s156
    %s171 = sphi 0, %s157
    %s175 = sphi 0, %s175
    %s177 = sphi 0, %s175
    %s178 = sphi 0, %s177
    %s192 = sphi 0, %s178
    %s196 = sphi 0, %s196
    %s198 = sphi 0, %s196
    %s199 = sphi 0, %s198
    %s213 = sphi 0, %s199
    %s221 = sphi 0, %s223
    %s224 = sphi 0, %s221
    %s225 = sphi 0, %s224
    %s241 = sphi 0, %s225
  $region4: #{tpu_custom_call.1} parent=0 // loop_header_branch
    %16 = sbr.rel (%p14) target = $region8
  $region5: #{tpu_custom_call.1} parent=0 // loop_body
    %s18 = ssub.s32 %s13, 1
    %s19 = ssub.s32 %s13, 2
    %s26 = sadd.s32 1, %s21
    %p27 = scmp.ge.s32.totalorder %s26, 2
    %s28 = scalar_select %p27, 0, %s26
    %s29 = sadd.s32 1, %s20
    %s30 = scalar_select %p27, %s29, %s20
    %p31 = scmp.ge.s32.totalorder %s30, 2
    %s32 = scalar_select %p31, 0, %s30
    %s33 = smul.u32 %s21, 8
    %s34 = ssub.s32 %s33, 1
    %p35 = scmp.gt.s32.totalorder %s34, 0
    %s36 = scalar_select %p35, %s34, 0
    %s37 = smul.u32 %s28, 8
    %s38 = ssub.s32 %s37, 1
    %p39 = scmp.gt.s32.totalorder %s38, 0
    %s40 = scalar_select %p39, %s38, 0
    %s41 = ssub.s32 %s20, %s32
    %s42 = ssub.s32 %s36, %s40
    %s43 = sor.u32 %s41, %s42
    %p44 = scmp.eq.s32.totalorder %s43, 0
    %s46 = sadd.s32 %s45, 1
    %s47 = scalar_select %p44, %s45, %s46
    %p50 = pneg %p44
    %p51 = scmp.eq.s32.totalorder %s13, 3
    %p52 = por %p50, %p51
    %p53 = scmp.ne.s32.totalorder %s45, %s48
    %p54 = scmp.eq.s32.totalorder %s13, 0
    %p55 = por %p53, %p54
    %p56 = scmp.ne.s32.totalorder %s45, %s48
    %p57 = scmp.eq.s32.totalorder %s18, 3
    %p58 = por %p56, %p57
    %p59 = scmp.ne.s32.totalorder %s48, %s49
    %p60 = scmp.eq.s32.totalorder %s18, 0
    %p61 = por %p59, %p60
    %p62 = scmp.ne.s32.totalorder %s48, %s49
    %p63 = scmp.eq.s32.totalorder %s19, 3
    %p64 = por %p62, %p63
    %p66 = scmp.ne.s32.totalorder %s49, %s65
    %p67 = scmp.eq.s32.totalorder %s19, 0
    %p68 = por %p66, %p67
    %s69 = ssub.s32 %s20, %s32
    %s70 = ssub.s32 %s21, %s28
    %s71 = sor.u32 %s69, %s70
    %p72 = scmp.eq.s32.totalorder %s71, 0
    %s74 = sadd.s32 %s73, 1
    %s75 = scalar_select %p72, %s73, %s74
    %p78 = pneg %p72
    %p79 = scmp.eq.s32.totalorder %s13, 3
    %p80 = por %p78, %p79
    %p81 = scmp.ne.s32.totalorder %s73, %s76
    %p82 = scmp.eq.s32.totalorder %s13, 0
    %p83 = por %p81, %p82
    %p84 = scmp.ne.s32.totalorder %s73, %s76
    %p85 = scmp.eq.s32.totalorder %s18, 3
    %p86 = por %p84, %p85
    %p87 = scmp.ne.s32.totalorder %s76, %s77
    %p88 = scmp.eq.s32.totalorder %s18, 0
    %p89 = por %p87, %p88
    %p90 = scmp.ne.s32.totalorder %s76, %s77
    %p91 = scmp.eq.s32.totalorder %s19, 3
    %p92 = por %p90, %p91
    %p94 = scmp.ne.s32.totalorder %s77, %s93
    %p95 = scmp.eq.s32.totalorder %s19, 0
    %p96 = por %p94, %p95
    %s97 = sadd.s32 %s21, 1
    %s98 = smul.u32 %s97, 8
    %p99 = scmp.lt.s32.totalorder %s98, 15
    %s100 = scalar_select %p99, %s98, 15
    %s101 = sadd.s32 %s28, 1
    %s102 = smul.u32 %s101, 8
    %p103 = scmp.lt.s32.totalorder %s102, 15
    %s104 = scalar_select %p103, %s102, 15
    %s105 = ssub.s32 %s20, %s32
    %s106 = ssub.s32 %s100, %s104
    %s107 = sor.u32 %s105, %s106
    %p108 = scmp.eq.s32.totalorder %s107, 0
    %s110 = sadd.s32 %s109, 1
    %s111 = scalar_select %p108, %s109, %s110
    %p114 = pneg %p108
    %p115 = scmp.eq.s32.totalorder %s13, 3
    %p116 = por %p114, %p115
    %p117 = scmp.ne.s32.totalorder %s109, %s112
    %p118 = scmp.eq.s32.totalorder %s13, 0
    %p119 = por %p117, %p118
    %p120 = scmp.ne.s32.totalorder %s109, %s112
    %p121 = scmp.eq.s32.totalorder %s18, 3
    %p122 = por %p120, %p121
    %p123 = scmp.ne.s32.totalorder %s112, %s113
    %p124 = scmp.eq.s32.totalorder %s18, 0
    %p125 = por %p123, %p124
    %p126 = scmp.ne.s32.totalorder %s112, %s113
    %p127 = scmp.eq.s32.totalorder %s19, 3
    %p128 = por %p126, %p127
    %p130 = scmp.ne.s32.totalorder %s113, %s129
    %p131 = scmp.eq.s32.totalorder %s19, 0
    %p132 = por %p130, %p131
    %s134 = sadd.s32 %s133, 1
    %p137 = scmp.eq.s32.totalorder %s13, 3
    %p138 = scmp.ne.s32.totalorder %s133, %s135
    %p139 = scmp.eq.s32.totalorder %s13, 0
    %p140 = por %p138, %p139
    %p141 = scmp.ne.s32.totalorder %s133, %s135
    %p142 = scmp.eq.s32.totalorder %s18, 3
    %p143 = por %p141, %p142
    %p144 = scmp.ne.s32.totalorder %s135, %s136
    %p145 = scmp.eq.s32.totalorder %s18, 0
    %p146 = por %p144, %p145
    %p147 = scmp.ne.s32.totalorder %s135, %s136
    %p148 = scmp.eq.s32.totalorder %s19, 3
    %p149 = por %p147, %p148
    %p151 = scmp.ne.s32.totalorder %s136, %s150
    %p152 = scmp.eq.s32.totalorder %s19, 0
    %p153 = por %p151, %p152
    %s155 = sadd.s32 %s154, 1
    %p158 = scmp.eq.s32.totalorder %s13, 3
    %p159 = scmp.ne.s32.totalorder %s154, %s156
    %p160 = scmp.eq.s32.totalorder %s13, 0
    %p161 = por %p159, %p160
    %p162 = scmp.ne.s32.totalorder %s154, %s156
    %p163 = scmp.eq.s32.totalorder %s18, 3
    %p164 = por %p162, %p163
    %p165 = scmp.ne.s32.totalorder %s156, %s157
    %p166 = scmp.eq.s32.totalorder %s18, 0
    %p167 = por %p165, %p166
    %p168 = scmp.ne.s32.totalorder %s156, %s157
    %p169 = scmp.eq.s32.totalorder %s19, 3
    %p170 = por %p168, %p169
    %p172 = scmp.ne.s32.totalorder %s157, %s171
    %p173 = scmp.eq.s32.totalorder %s19, 0
    %p174 = por %p172, %p173
    %s176 = sadd.s32 %s175, 1
    %p179 = scmp.eq.s32.totalorder %s13, 3
    %p180 = scmp.ne.s32.totalorder %s175, %s177
    %p181 = scmp.eq.s32.totalorder %s13, 0
    %p182 = por %p180, %p181
    %p183 = scmp.ne.s32.totalorder %s175, %s177
    %p184 = scmp.eq.s32.totalorder %s18, 3
    %p185 = por %p183, %p184
    %p186 = scmp.ne.s32.totalorder %s177, %s178
    %p187 = scmp.eq.s32.totalorder %s18, 0
    %p188 = por %p186, %p187
    %p189 = scmp.ne.s32.totalorder %s177, %s178
    %p190 = scmp.eq.s32.totalorder %s19, 3
    %p191 = por %p189, %p190
    %p193 = scmp.ne.s32.totalorder %s178, %s192
    %p194 = scmp.eq.s32.totalorder %s19, 0
    %p195 = por %p193, %p194
    %s197 = sadd.s32 %s196, 1
    %p200 = scmp.eq.s32.totalorder %s13, 3
    %p201 = scmp.ne.s32.totalorder %s196, %s198
    %p202 = scmp.eq.s32.totalorder %s13, 0
    %p203 = por %p201, %p202
    %p204 = scmp.ne.s32.totalorder %s196, %s198
    %p205 = scmp.eq.s32.totalorder %s18, 3
    %p206 = por %p204, %p205
    %p207 = scmp.ne.s32.totalorder %s198, %s199
    %p208 = scmp.eq.s32.totalorder %s18, 0
    %p209 = por %p207, %p208
    %p210 = scmp.ne.s32.totalorder %s198, %s199
    %p211 = scmp.eq.s32.totalorder %s19, 3
    %p212 = por %p210, %p211
    %p214 = scmp.ne.s32.totalorder %s199, %s213
    %p215 = scmp.eq.s32.totalorder %s19, 0
    %p216 = por %p214, %p215
    %s217 = ssub.s32 %s20, %s32
    %s218 = ssub.s32 %s21, %s28
    %s219 = sor.u32 %s217, %s218
    %p220 = scmp.eq.s32.totalorder %s219, 0
    %s222 = sadd.s32 %s221, 1
    %s223 = scalar_select %p220, %s221, %s222
    %p226 = pneg %p220
    %p227 = scmp.eq.s32.totalorder %s13, 3
    %p228 = por %p226, %p227
    %p229 = scmp.ne.s32.totalorder %s221, %s224
    %p230 = scmp.eq.s32.totalorder %s13, 0
    %p231 = por %p229, %p230
    %p232 = scmp.ne.s32.totalorder %s221, %s224
    %p233 = scmp.eq.s32.totalorder %s18, 3
    %p234 = por %p232, %p233
    %p235 = scmp.ne.s32.totalorder %s224, %s225
    %p236 = scmp.eq.s32.totalorder %s18, 0
    %p237 = por %p235, %p236
    %p238 = scmp.ne.s32.totalorder %s224, %s225
    %p239 = scmp.eq.s32.totalorder %s19, 3
    %p240 = por %p238, %p239
    %p242 = scmp.ne.s32.totalorder %s225, %s241
    %p243 = scmp.eq.s32.totalorder %s19, 0
    %p244 = por %p242, %p243
    %p245 = scmp.le.s32.totalorder 1, %s13
    %p246 = scmp.lt.s32.totalorder %s13, 5
    %p247 = pnand %p245, %p246
    %p248 = pneg %p247
    // Predicated region
    $region9: #{tpu_custom_call.1} parent=5 // pred_check
      _
    $region10: #{tpu_custom_call.1} parent=5 // pred_check_branch
      %250 = sbr.rel (%p247) target = $region12
    $region11: #{tpu_custom_call.1} parent=5 // pred_region
      %s251 = ssub.s32 %s13, 1
      // Predicated region
      $region13: #{tpu_custom_call.1} parent=11 // pred_check
        %p252 = pneg %p146
      $region14: #{tpu_custom_call.1} parent=11 // pred_check_branch
        %254 = sbr.rel (%p252) target = $region16
      $region15: #{tpu_custom_call.1} parent=11 // pred_region
        _
      $region16: #{tpu_custom_call.1} parent=11 // pred_fallthru
        _
      // Predicated region
      $region17: #{tpu_custom_call.1} parent=11 // pred_check
        %p255 = pneg %p167
      $region18: #{tpu_custom_call.1} parent=11 // pred_check_branch
        %257 = sbr.rel (%p255) target = $region20
      $region19: #{tpu_custom_call.1} parent=11 // pred_region
        _
      $region20: #{tpu_custom_call.1} parent=11 // pred_fallthru
        _
      // Predicated region
      $region21: #{tpu_custom_call.1} parent=11 // pred_check
        %p258 = pneg %p188
      $region22: #{tpu_custom_call.1} parent=11 // pred_check_branch
        %260 = sbr.rel (%p258) target = $region24
      $region23: #{tpu_custom_call.1} parent=11 // pred_region
        _
      $region24: #{tpu_custom_call.1} parent=11 // pred_fallthru
        _
      // Predicated region
      $region25: #{tpu_custom_call.1} parent=11 // pred_check
        %p261 = pneg %p209
      $region26: #{tpu_custom_call.1} parent=11 // pred_check_branch
        %263 = sbr.rel (%p261) target = $region28
      $region27: #{tpu_custom_call.1} parent=11 // pred_region
        _
      $region28: #{tpu_custom_call.1} parent=11 // pred_fallthru
        _
    $region12: #{tpu_custom_call.1} parent=5 // pred_fallthru
      _
    %p264 = scmp.lt.s32.totalorder %s13, 4
    // Predicated region
    $region29: #{tpu_custom_call.1} parent=5 // pred_check
      %p265 = pneg %p264
    $region30: #{tpu_custom_call.1} parent=5 // pred_check_branch
      %267 = sbr.rel (%p265) target = $region32
    $region31: #{tpu_custom_call.1} parent=5 // pred_region
      // Predicated region
      $region33: #{tpu_custom_call.1} parent=31 // pred_check
        %p268 = pneg %p55
      $region34: #{tpu_custom_call.1} parent=31 // pred_check_branch
        %270 = sbr.rel (%p268) target = $region36
      $region35: #{tpu_custom_call.1} parent=31 // pred_region
        %s271 = smul.u32 %s21, 8
        %s272 = ssub.s32 %s271, 1
        %p273 = scmp.gt.s32.totalorder %s272, 0
        %s274 = scalar_select %p273, %s272, 0
        %p275 = scmp.lt.s32.totalorder %s20, 1
        %s276 = scalar_select %p275, %s20, 1
        %p277 = scmp.lt.s32.totalorder %s274, 15
        %s278 = scalar_select %p277, %s274, 15
        %s279 = smul.addr %s278, 2
        %s280 = smul.addr %s276, 32
        %s281 = sadd.s32 %s279, %s280
        %s282 = smul.addr %s281, 8
        %s283 = scalar_lea.vmem %s0, %s282
        %s284 = smul.u32 %s21, 8
        %s285 = ssub.s32 %s284, 1
        %p286 = scmp.gt.s32.totalorder %s285, 0
        %s287 = scalar_select %p286, %s285, 0
      $region36: #{tpu_custom_call.1} parent=31 // pred_fallthru
        _
      // Predicated region
      $region37: #{tpu_custom_call.1} parent=31 // pred_check
        %p288 = pneg %p83
      $region38: #{tpu_custom_call.1} parent=31 // pred_check_branch
        %290 = sbr.rel (%p288) target = $region40
      $region39: #{tpu_custom_call.1} parent=31 // pred_region
        %s291 = smul.u32 8, %s21
        %p292 = scmp.lt.s32.totalorder %s20, 1
        %s293 = scalar_select %p292, %s20, 1
        %p294 = scmp.lt.s32.totalorder %s291, 15
        %s295 = scalar_select %p294, %s291, 15
        %s296 = smul.addr %s295, 2
        %s297 = smul.addr %s293, 32
        %s298 = sadd.s32 %s296, %s297
        %s299 = smul.addr %s298, 8
        %s300 = scalar_lea.vmem %s1, %s299
        %s301 = smul.u32 8, %s21
      $region40: #{tpu_custom_call.1} parent=31 // pred_fallthru
        _
      // Predicated region
      $region41: #{tpu_custom_call.1} parent=31 // pred_check
        %p302 = pneg %p119
      $region42: #{tpu_custom_call.1} parent=31 // pred_check_branch
        %304 = sbr.rel (%p302) target = $region44
      $region43: #{tpu_custom_call.1} parent=31 // pred_region
        %s305 = sadd.s32 %s21, 1
        %s306 = smul.u32 %s305, 8
        %p307 = scmp.lt.s32.totalorder %s306, 15
        %s308 = scalar_select %p307, %s306, 15
        %p309 = scmp.lt.s32.totalorder %s20, 1
        %s310 = scalar_select %p309, %s20, 1
        %p311 = scmp.lt.s32.totalorder %s308, 15
        %s312 = scalar_select %p311, %s308, 15
        %s313 = smul.addr %s312, 2
        %s314 = smul.addr %s310, 32
        %s315 = sadd.s32 %s313, %s314
        %s316 = smul.addr %s315, 8
        %s317 = scalar_lea.vmem %s2, %s316
        %s318 = sadd.s32 %s21, 1
        %s319 = smul.u32 %s318, 8
        %p320 = scmp.lt.s32.totalorder %s319, 15
        %s321 = scalar_select %p320, %s319, 15
      $region44: #{tpu_custom_call.1} parent=31 // pred_fallthru
        _
    $region32: #{tpu_custom_call.1} parent=5 // pred_fallthru
      _
    %p322 = scmp.le.s32.totalorder 1, %s13
    %p323 = scmp.lt.s32.totalorder %s13, 5
    %p324 = pnand %p322, %p323
    %p325 = pneg %p324
    // Predicated region
    $region45: #{tpu_custom_call.1} parent=5 // pred_check
      _
    $region46: #{tpu_custom_call.1} parent=5 // pred_check_branch
      %327 = sbr.rel (%p324) target = $region48
    $region47: #{tpu_custom_call.1} parent=5 // pred_region
      %s328 = ssub.s32 %s13, 1
      %s329 = smul.u32 %s23, 8
      %s330 = ssub.s32 %s329, 1
      %p331 = scmp.gt.s32.totalorder %s330, 0
      %s332 = scalar_select %p331, %s330, 0
      %p333 = scmp.lt.s32.totalorder %s22, 1
      %s334 = scalar_select %p333, %s22, 1
      %p335 = scmp.lt.s32.totalorder %s332, 15
      %s336 = scalar_select %p335, %s332, 15
      %s337 = smul.addr %s336, 2
      %s338 = smul.addr %s334, 32
      %s339 = sadd.s32 %s337, %s338
      %s340 = smul.addr %s339, 8
      %s341 = scalar_lea.vmem %s0, %s340
      %p342 = pneg %p61
      %p343 = pneg %p58
      %s344 = smul.u32 8, %s23
      %p345 = scmp.lt.s32.totalorder %s22, 1
      %s346 = scalar_select %p345, %s22, 1
      %p347 = scmp.lt.s32.totalorder %s344, 15
      %s348 = scalar_select %p347, %s344, 15
      %s349 = smul.addr %s348, 2
      %s350 = smul.addr %s346, 32
      %s351 = sadd.s32 %s349, %s350
      %s352 = smul.addr %s351, 8
      %s353 = scalar_lea.vmem %s1, %s352
      %p354 = pneg %p89
      %p355 = pneg %p86
      %s356 = sadd.s32 %s23, 1
      %s357 = smul.u32 %s356, 8
      %p358 = scmp.lt.s32.totalorder %s357, 15
      %s359 = scalar_select %p358, %s357, 15
      %p360 = scmp.lt.s32.totalorder %s22, 1
      %s361 = scalar_select %p360, %s22, 1
      %p362 = scmp.lt.s32.totalorder %s359, 15
      %s363 = scalar_select %p362, %s359, 15
      %s364 = smul.addr %s363, 2
      %s365 = smul.addr %s361, 32
      %s366 = sadd.s32 %s364, %s365
      %s367 = smul.addr %s366, 8
      %s368 = scalar_lea.vmem %s2, %s367
      %p369 = pneg %p125
      %p370 = pneg %p122
      %p371 = pneg %p146
      %p372 = pneg %p143
      %p373 = pneg %p167
      %p374 = pneg %p164
      %p375 = pneg %p188
      %p376 = pneg %p185
      %p377 = pneg %p209
      %p378 = pneg %p206
      %p379 = pneg %p237
      %p380 = pneg %p234
      %s381 = smul.u32 8, %s23
      %p382 = scmp.lt.s32.totalorder %s22, 1
      %s383 = scalar_select %p382, %s22, 1
      %p384 = scmp.lt.s32.totalorder %s381, 15
      %s385 = scalar_select %p384, %s381, 15
      %s386 = smul.addr %s385, 2
      %s387 = smul.addr %s383, 32
      %s388 = sadd.s32 %s386, %s387
      %s389 = smul.addr %s388, 8
      %s390 = scalar_lea.vmem %s7, %s389
      %s391 = smul.u32 %s23, 8
      %s392 = ssub.s32 %s391, 1
      %p393 = scmp.gt.s32.totalorder %s392, 0
      %s394 = scalar_select %p393, %s392, 0
      %p395 = scmp.lt.s32.totalorder %s22, 1
      %s396 = scalar_select %p395, %s22, 1
      %p397 = scmp.lt.s32.totalorder %s394, 15
      %s398 = scalar_select %p397, %s394, 15
      %s399 = smul.addr %s398, 2
      %s400 = smul.addr %s396, 32
      %s401 = sadd.s32 %s399, %s400
      %s402 = smul.addr %s401, 8
      %s403 = scalar_lea.vmem %s0, %s402
      %s404 = smul.u32 %s23, 8
      %s405 = ssub.s32 %s404, 1
      %p406 = scmp.gt.s32.totalorder %s405, 0
      %s407 = scalar_select %p406, %s405, 0
      %s408 = smul.u32 8, %s23
      %p409 = scmp.lt.s32.totalorder %s22, 1
      %s410 = scalar_select %p409, %s22, 1
      %p411 = scmp.lt.s32.totalorder %s408, 15
      %s412 = scalar_select %p411, %s408, 15
      %s413 = smul.addr %s412, 2
      %s414 = smul.addr %s410, 32
      %s415 = sadd.s32 %s413, %s414
      %s416 = smul.addr %s415, 8
      %s417 = scalar_lea.vmem %s1, %s416
      %s418 = smul.u32 8, %s23
      %s419 = sadd.s32 %s23, 1
      %s420 = smul.u32 %s419, 8
      %p421 = scmp.lt.s32.totalorder %s420, 15
      %s422 = scalar_select %p421, %s420, 15
      %p423 = scmp.lt.s32.totalorder %s22, 1
      %s424 = scalar_select %p423, %s22, 1
      %p425 = scmp.lt.s32.totalorder %s422, 15
      %s426 = scalar_select %p425, %s422, 15
      %s427 = smul.addr %s426, 2
      %s428 = smul.addr %s424, 32
      %s429 = sadd.s32 %s427, %s428
      %s430 = smul.addr %s429, 8
      %s431 = scalar_lea.vmem %s2, %s430
      %s432 = sadd.s32 %s23, 1
      %s433 = smul.u32 %s432, 8
      %p434 = scmp.lt.s32.totalorder %s433, 15
      %s435 = scalar_select %p434, %s433, 15
      %s436 = smul.u32 8, %s23
      %p437 = scmp.lt.s32.totalorder %s22, 1
      %s438 = scalar_select %p437, %s22, 1
      %p439 = scmp.lt.s32.totalorder %s436, 15
      %s440 = scalar_select %p439, %s436, 15
      %s441 = smul.addr %s440, 2
      %s442 = smul.addr %s438, 32
      %s443 = sadd.s32 %s441, %s442
      %s444 = smul.addr %s443, 8
      %s445 = scalar_lea.vmem %s7, %s444
      %s446 = smul.u32 8, %s23
      %v447 = vld [vmem:[%s417] sm:$0xff]
      %v448 = vld [vmem:[%s417 + $0x8] sm:$0xff]
      %v449 = vld [vmem:[%s417 + $0x10] sm:$0xff]
      %v450 = vld [vmem:[%s417 + $0x18] sm:$0xff]
      %v451 = vld [vmem:[%s417 + $0x20] sm:$0xff]
      %v452 = vld [vmem:[%s417 + $0x28] sm:$0xff]
      %v453 = vld [vmem:[%s417 + $0x30] sm:$0xff]
      %v454 = vld [vmem:[%s417 + $0x38] sm:$0xff]
      %v455 = vld [vmem:[%s417 + $0x40] sm:$0xff]
      %v456 = vld [vmem:[%s417 + $0x48] sm:$0xff]
      %v457 = vld [vmem:[%s417 + $0x50] sm:$0xff]
      %v458 = vld [vmem:[%s417 + $0x58] sm:$0xff]
      %v459 = vld [vmem:[%s417 + $0x60] sm:$0xff]
      %v460 = vld [vmem:[%s417 + $0x68] sm:$0xff]
      %v461 = vld [vmem:[%s417 + $0x70] sm:$0xff]
      %v462 = vld [vmem:[%s417 + $0x78] sm:$0xff]
      %v463 = vld [vmem:[%s403] sm:$0xff]
      %v464 = vld [vmem:[%s403 + $0x8] sm:$0xff]
      %v465 = vld [vmem:[%s431] sm:$0xff]
      %v466 = vld [vmem:[%s431 + $0x8] sm:$0xff]
      %v467 = vld [vmem:[%s3] sm:$0xf]
      %vm468 = vcmask 31744
      %v470 = vsel %vm468, %v463, 0
      %v473 = vsel %vm468, %v464, 0
      %v476 = vsel %vm468, %v447, 0
      %v479 = vsel %vm468, %v448, 0
      %v482 = vsel %vm468, %v449, 0
      %v485 = vsel %vm468, %v450, 0
      %v488 = vsel %vm468, %v451, 0
      %v491 = vsel %vm468, %v452, 0
      %v494 = vsel %vm468, %v453, 0
      %v497 = vsel %vm468, %v454, 0
      %v500 = vsel %vm468, %v455, 0
      %v503 = vsel %vm468, %v456, 0
      %v506 = vsel %vm468, %v457, 0
      %v509 = vsel %vm468, %v458, 0
      %v512 = vsel %vm468, %v459, 0
      %v515 = vsel %vm468, %v460, 0
      %v518 = vsel %vm468, %v461, 0
      %v521 = vsel %vm468, %v462, 0
      %v524 = vsel %vm468, %v465, 0
      %v527 = vsel %vm468, %v466, 0
      %vm529 = vcmask 1043456
      %v531 = vsel %vm529, %v467, 0
      %533 = vmatprep.subr.mxu0 0.0
      %534 = vmatpush1.msra.mxu0 0.0
      %535 = vmatprep.subr.mxu0 0.0
      %536 = vmatpush1.msra.mxu0 0.0
      %537 = vmatprep.subr.mxu0 0.0
      %538 = vmatpush1.msra.mxu0 0.0
      %539 = vmatprep.subr.mxu0 0.0
      %540 = vmatpush1.msra.mxu0 0.0
      %541 = vmatprep.subr.mxu0 0.0
      %542 = vmatpush1.msra.mxu0 0.0
      %543 = vmatprep.subr.mxu0 0.0
      %544 = vmatpush1.msra.mxu0 0.0
      %545 = vmatprep.subr.mxu0 0.0
      %546 = vmatpush1.msra.mxu0 0.0
      %547 = vmatprep.subr.mxu0 0.0
      %548 = vmatpush1.msra.mxu0 0.0
      %549 = vmatprep.subr.mxu0 0.0
      %550 = vmatpush1.msra.mxu0 0.0
      %551 = vmatprep.subr.mxu0 0.0
      %552 = vmatpush1.msra.mxu0 0.0
      %553 = vmatprep.subr.mxu0 0.0
      %554 = vmatpush1.msra.mxu0 0.0
      %555 = vmatprep.subr.mxu0 0.0
      %556 = vmatpush1.msra.mxu0 0.0
      %557 = vmatprep.subr.mxu0 0.0
      %558 = vmatpush1.msra.mxu0 0.0
      %559 = vmatprep.subr.mxu0 0.0
      %560 = vmatpush1.msra.mxu0 0.0
      %561 = vmatprep.subr.mxu0 0.0
      %562 = vmatpush1.msra.mxu0 0.0
      %563 = vmatprep.subr.mxu0 0.0
      %564 = vmatpush1.msra.mxu0 %v531
      %565 = vmatprep.subr.mxu0 0.0
      %566 = vmatpush2.msra.mxu0 0.0
      %567 = vmatprep.subr.mxu0 0.0
      %568 = vmatpush2.msra.mxu0 0.0
      %569 = vmatprep.subr.mxu0 0.0
      %570 = vmatpush2.msra.mxu0 0.0
      %571 = vmatprep.subr.mxu0 0.0
      %572 = vmatpush2.msra.mxu0 0.0
      %573 = vmatprep.subr.mxu0 0.0
      %574 = vmatpush2.msra.mxu0 0.0
      %575 = vmatprep.subr.mxu0 0.0
      %576 = vmatpush2.msra.mxu0 0.0
      %577 = vmatprep.subr.mxu0 0.0
      %578 = vmatpush2.msra.mxu0 0.0
      %579 = vmatprep.subr.mxu0 0.0
      %580 = vmatpush2.msra.mxu0 0.0
      %581 = vmatprep.subr.mxu0 0.0
      %582 = vmatpush2.msra.mxu0 0.0
      %583 = vmatprep.subr.mxu0 0.0
      %584 = vmatpush2.msra.mxu0 0.0
      %585 = vmatprep.subr.mxu0 0.0
      %586 = vmatpush2.msra.mxu0 0.0
      %587 = vmatprep.subr.mxu0 0.0
      %588 = vmatpush2.msra.mxu0 0.0
      %589 = vmatprep.subr.mxu0 0.0
      %590 = vmatpush2.msra.mxu0 0.0
      %591 = vmatprep.subr.mxu0 0.0
      %592 = vmatpush2.msra.mxu0 0.0
      %593 = vmatprep.subr.mxu0 0.0
      %594 = vmatpush2.msra.mxu0 0.0
      %595 = vmatprep.subr.mxu0 0.0
      %596 = vmatpush2.msra.mxu0 0.0
      %597 = vmatprep.mubr.f32.mxu0 0.0
      %598 = vmatmul.mubr.f32.gmra.mxu0 %v470
      %v599 = vpop.f32.mrf.mxu0
      %v600 = vadd.f32 0.0, %v599
      %v601 = vpop.f32.mrf.mxu0
      %602 = vmatprep.mubr.f32.mxu0 0.0
      %603 = vmatmul.mubr.f32.gmra.mxu0 %v473
      %v604 = vpop.f32.mrf.mxu0
      %v605 = vadd.f32 0.0, %v604
      %v606 = vpop.f32.mrf.mxu0
      %607 = vmatprep.mubr.f32.mxu0 0.0
      %608 = vmatmul.mubr.f32.gmra.mxu0 %v476
      %v609 = vpop.f32.mrf.mxu0
      %v610 = vadd.f32 0.0, %v609
      %v611 = vpop.f32.mrf.mxu0
      %612 = vmatprep.mubr.f32.mxu0 0.0
      %613 = vmatmul.mubr.f32.gmra.mxu0 %v479
      %v614 = vpop.f32.mrf.mxu0
      %v615 = vadd.f32 0.0, %v614
      %v616 = vpop.f32.mrf.mxu0
      %617 = vmatprep.mubr.f32.mxu0 0.0
      %618 = vmatmul.mubr.f32.gmra.mxu0 %v482
      %v619 = vpop.f32.mrf.mxu0
      %v620 = vadd.f32 0.0, %v619
      %v621 = vpop.f32.mrf.mxu0
      %622 = vmatprep.mubr.f32.mxu0 0.0
      %623 = vmatmul.mubr.f32.gmra.mxu0 %v485
      %v624 = vpop.f32.mrf.mxu0
      %v625 = vadd.f32 0.0, %v624
      %v626 = vpop.f32.mrf.mxu0
      %627 = vmatprep.mubr.f32.mxu0 0.0
      %628 = vmatmul.mubr.f32.gmra.mxu0 %v488
      %v629 = vpop.f32.mrf.mxu0
      %v630 = vadd.f32 0.0, %v629
      %v631 = vpop.f32.mrf.mxu0
      %632 = vmatprep.mubr.f32.mxu0 0.0
      %633 = vmatmul.mubr.f32.gmra.mxu0 %v491
      %v634 = vpop.f32.mrf.mxu0
      %v635 = vadd.f32 0.0, %v634
      %v636 = vpop.f32.mrf.mxu0
      %637 = vmatprep.mubr.f32.mxu0 0.0
      %638 = vmatmul.mubr.f32.gmra.mxu0 %v494
      %v639 = vpop.f32.mrf.mxu0
      %v640 = vadd.f32 0.0, %v639
      %v641 = vpop.f32.mrf.mxu0
      %642 = vmatprep.mubr.f32.mxu0 0.0
      %643 = vmatmul.mubr.f32.gmra.mxu0 %v497
      %v644 = vpop.f32.mrf.mxu0
      %v645 = vadd.f32 0.0, %v644
      %v646 = vpop.f32.mrf.mxu0
      %647 = vmatprep.mubr.f32.mxu0 0.0
      %648 = vmatmul.mubr.f32.gmra.mxu0 %v500
      %v649 = vpop.f32.mrf.mxu0
      %v650 = vadd.f32 0.0, %v649
      %v651 = vpop.f32.mrf.mxu0
      %652 = vmatprep.mubr.f32.mxu0 0.0
      %653 = vmatmul.mubr.f32.gmra.mxu0 %v503
      %v654 = vpop.f32.mrf.mxu0
      %v655 = vadd.f32 0.0, %v654
      %v656 = vpop.f32.mrf.mxu0
      %657 = vmatprep.mubr.f32.mxu0 0.0
      %658 = vmatmul.mubr.f32.gmra.mxu0 %v506
      %v659 = vpop.f32.mrf.mxu0
      %v660 = vadd.f32 0.0, %v659
      %v661 = vpop.f32.mrf.mxu0
      %662 = vmatprep.mubr.f32.mxu0 0.0
      %663 = vmatmul.mubr.f32.gmra.mxu0 %v509
      %v664 = vpop.f32.mrf.mxu0
      %v665 = vadd.f32 0.0, %v664
      %v666 = vpop.f32.mrf.mxu0
      %667 = vmatprep.mubr.f32.mxu0 0.0
      %668 = vmatmul.mubr.f32.gmra.mxu0 %v512
      %v669 = vpop.f32.mrf.mxu0
      %v670 = vadd.f32 0.0, %v669
      %v671 = vpop.f32.mrf.mxu0
      %672 = vmatprep.mubr.f32.mxu0 0.0
      %673 = vmatmul.mubr.f32.gmra.mxu0 %v515
      %v674 = vpop.f32.mrf.mxu0
      %v675 = vadd.f32 0.0, %v674
      %v676 = vpop.f32.mrf.mxu0
      %677 = vmatprep.mubr.f32.mxu0 0.0
      %678 = vmatmul.mubr.f32.gmra.mxu0 %v518
      %v679 = vpop.f32.mrf.mxu0
      %v680 = vadd.f32 0.0, %v679
      %v681 = vpop.f32.mrf.mxu0
      %682 = vmatprep.mubr.f32.mxu0 0.0
      %683 = vmatmul.mubr.f32.gmra.mxu0 %v521
      %v684 = vpop.f32.mrf.mxu0
      %v685 = vadd.f32 0.0, %v684
      %v686 = vpop.f32.mrf.mxu0
      %687 = vmatprep.mubr.f32.mxu0 0.0
      %688 = vmatmul.mubr.f32.gmra.mxu0 %v524
      %v689 = vpop.f32.mrf.mxu0
      %v690 = vadd.f32 0.0, %v689
      %v691 = vpop.f32.mrf.mxu0
      %692 = vmatprep.mubr.f32.mxu0 0.0
      %693 = vmatmul.mubr.f32.gmra.mxu0 %v527
      %v694 = vpop.f32.mrf.mxu0
      %v695 = vadd.f32 0.0, %v694
      %v696 = vpop.f32.mrf.mxu0
      %697 = vdwg.mxu0
      %v698 = vld [vmem:[%s4] sm:$0x1]
      %v700 = vlaneseq
      %v701 = vshrl.u32 %v700, 7
      %v702 = vsub.s32 0, %v701
      %v703 = vrot.slane %v698, %v702
      %v705 = vmul.f32 %v600, %v703
      %v706 = vmul.f32 %v605, %v703
      %v707 = vmul.f32 %v610, %v703
      %v708 = vmul.f32 %v615, %v703
      %v709 = vmul.f32 %v620, %v703
      %v710 = vmul.f32 %v625, %v703
      %v711 = vmul.f32 %v630, %v703
      %v712 = vmul.f32 %v635, %v703
      %v713 = vmul.f32 %v640, %v703
      %v714 = vmul.f32 %v645, %v703
      %v715 = vmul.f32 %v650, %v703
      %v716 = vmul.f32 %v655, %v703
      %v717 = vmul.f32 %v660, %v703
      %v718 = vmul.f32 %v665, %v703
      %v719 = vmul.f32 %v670, %v703
      %v720 = vmul.f32 %v675, %v703
      %v721 = vmul.f32 %v680, %v703
      %v722 = vmul.f32 %v685, %v703
      %v723 = vmul.f32 %v690, %v703
      %v724 = vmul.f32 %v695, %v703
      %s725 = scalar_lea.vmem %s4, 1
      %v726 = vld [vmem:[%s725] sm:$0x1]
      %v728 = vlaneseq
      %v729 = vshrl.u32 %v728, 7
      %v730 = vsub.s32 0, %v729
      %v731 = vrot.slane %v726, %v730
      %v733 = vadd.f32 %v705, %v731
      %v734 = vadd.f32 %v706, %v731
      %v735 = vadd.f32 %v707, %v731
      %v736 = vadd.f32 %v708, %v731
      %v737 = vadd.f32 %v709, %v731
      %v738 = vadd.f32 %v710, %v731
      %v739 = vadd.f32 %v711, %v731
      %v740 = vadd.f32 %v712, %v731
      %v741 = vadd.f32 %v713, %v731
      %v742 = vadd.f32 %v714, %v731
      %v743 = vadd.f32 %v715, %v731
      %v744 = vadd.f32 %v716, %v731
      %v745 = vadd.f32 %v717, %v731
      %v746 = vadd.f32 %v718, %v731
      %v747 = vadd.f32 %v719, %v731
      %v748 = vadd.f32 %v720, %v731
      %v749 = vadd.f32 %v721, %v731
      %v750 = vadd.f32 %v722, %v731
      %v751 = vadd.f32 %v723, %v731
      %v752 = vadd.f32 %v724, %v731
      %vm753 = vcmp.gt.f32.partialorder %v733, 0.0
      %vm754 = vcmp.gt.f32.partialorder %v734, 0.0
      %vm755 = vcmp.gt.f32.partialorder %v735, 0.0
      %vm756 = vcmp.gt.f32.partialorder %v736, 0.0
      %vm757 = vcmp.gt.f32.partialorder %v737, 0.0
      %vm758 = vcmp.gt.f32.partialorder %v738, 0.0
      %vm759 = vcmp.gt.f32.partialorder %v739, 0.0
      %vm760 = vcmp.gt.f32.partialorder %v740, 0.0
      %vm761 = vcmp.gt.f32.partialorder %v741, 0.0
      %vm762 = vcmp.gt.f32.partialorder %v742, 0.0
      %vm763 = vcmp.gt.f32.partialorder %v743, 0.0
      %vm764 = vcmp.gt.f32.partialorder %v744, 0.0
      %vm765 = vcmp.gt.f32.partialorder %v745, 0.0
      %vm766 = vcmp.gt.f32.partialorder %v746, 0.0
      %vm767 = vcmp.gt.f32.partialorder %v747, 0.0
      %vm768 = vcmp.gt.f32.partialorder %v748, 0.0
      %vm769 = vcmp.gt.f32.partialorder %v749, 0.0
      %vm770 = vcmp.gt.f32.partialorder %v750, 0.0
      %vm771 = vcmp.gt.f32.partialorder %v751, 0.0
      %vm772 = vcmp.gt.f32.partialorder %v752, 0.0
      %v773 = vmul.f32 %v733, 0.1
      %v774 = vmul.f32 %v734, 0.1
      %v775 = vmul.f32 %v735, 0.1
      %v776 = vmul.f32 %v736, 0.1
      %v777 = vmul.f32 %v737, 0.1
      %v778 = vmul.f32 %v738, 0.1
      %v779 = vmul.f32 %v739, 0.1
      %v780 = vmul.f32 %v740, 0.1
      %v781 = vmul.f32 %v741, 0.1
      %v782 = vmul.f32 %v742, 0.1
      %v783 = vmul.f32 %v743, 0.1
      %v784 = vmul.f32 %v744, 0.1
      %v785 = vmul.f32 %v745, 0.1
      %v786 = vmul.f32 %v746, 0.1
      %v787 = vmul.f32 %v747, 0.1
      %v788 = vmul.f32 %v748, 0.1
      %v789 = vmul.f32 %v749, 0.1
      %v790 = vmul.f32 %v750, 0.1
      %v791 = vmul.f32 %v751, 0.1
      %v792 = vmul.f32 %v752, 0.1
      %v793 = vsel %vm753, %v733, %v773
      %v794 = vsel %vm754, %v734, %v774
      %v795 = vsel %vm755, %v735, %v775
      %v796 = vsel %vm756, %v736, %v776
      %v797 = vsel %vm757, %v737, %v777
      %v798 = vsel %vm758, %v738, %v778
      %v799 = vsel %vm759, %v739, %v779
      %v800 = vsel %vm760, %v740, %v780
      %v801 = vsel %vm761, %v741, %v781
      %v802 = vsel %vm762, %v742, %v782
      %v803 = vsel %vm763, %v743, %v783
      %v804 = vsel %vm764, %v744, %v784
      %v805 = vsel %vm765, %v745, %v785
      %v806 = vsel %vm766, %v746, %v786
      %v807 = vsel %vm767, %v747, %v787
      %v808 = vsel %vm768, %v748, %v788
      %v809 = vsel %vm769, %v749, %v789
      %v810 = vsel %vm770, %v750, %v790
      %v811 = vsel %vm771, %v751, %v791
      %v812 = vsel %vm772, %v752, %v792
      %p813 = scmp.gt.s32.totalorder %s23, 0
      %s814 = scalar_select %p813, 1, 0
      %v815 = vstv %s814
      %vm816 = vcmp.eq.s32.totalorder %v815, 1
      %p817 = scmp.lt.s32.totalorder %s23, 1
      %s818 = scalar_select %p817, 1, 0
      %v819 = vstv %s818
      %vm820 = vcmp.eq.s32.totalorder %v819, 1
      %v821 = vsel %vm816, 1, 0
      %v822 = vsel %vm820, 1, 0
      %vm823 = vcmp.eq.s32.totalorder %v821, 1
      %vm824 = vcmp.eq.s32.totalorder %v822, 1
      %v825 = vsel %vm823, %v793, 0.0
      %v826 = vsel %vm823, %v794, 0.0
      %v827 = vsel 1, %v795, 0.0
      %v828 = vsel 1, %v796, 0.0
      %v829 = vsel 1, %v797, 0.0
      %v830 = vsel 1, %v798, 0.0
      %v831 = vsel 1, %v799, 0.0
      %v832 = vsel 1, %v800, 0.0
      %v833 = vsel 1, %v801, 0.0
      %v834 = vsel 1, %v802, 0.0
      %v835 = vsel 1, %v803, 0.0
      %v836 = vsel 1, %v804, 0.0
      %v837 = vsel 1, %v805, 0.0
      %v838 = vsel 1, %v806, 0.0
      %v839 = vsel 1, %v807, 0.0
      %v840 = vsel 1, %v808, 0.0
      %v841 = vsel 1, %v809, 0.0
      %v842 = vsel 1, %v810, 0.0
      %v843 = vsel %vm824, %v811, 0.0
      %v844 = vsel %vm824, %v812, 0.0
      %v845 = vlaneseq
      %v846 = vshrl.u32 %v845, 7
      %v847 = vadd.s32 %v846, 8
      %vm848 = vcmp.gt.s32.totalorder %v846, 0
      %vm849 = vcmp.gt.s32.totalorder %v847, 0
      %v850 = vrot.slane %v825, 7
      %v851 = vrot.slane %v827, 7
      %v852 = vrot.slane %v829, 7
      %v853 = vrot.slane %v831, 7
      %v854 = vrot.slane %v833, 7
      %v855 = vrot.slane %v835, 7
      %v856 = vrot.slane %v837, 7
      %v857 = vrot.slane %v839, 7
      %v858 = vrot.slane %v841, 7
      %v859 = vrot.slane %v843, 7
      %v860 = vrot.slane %v826, 7
      %v861 = vrot.slane %v828, 7
      %v862 = vrot.slane %v830, 7
      %v863 = vrot.slane %v832, 7
      %v864 = vrot.slane %v834, 7
      %v865 = vrot.slane %v836, 7
      %v866 = vrot.slane %v838, 7
      %v867 = vrot.slane %v840, 7
      %v868 = vrot.slane %v842, 7
      %v869 = vrot.slane %v844, 7
      %vm870 = vcmp.lt.s32.totalorder %v846, 1
      %v871 = vsel %vm870, %v850, %v860
      %v872 = vsel %vm870, %v851, %v861
      %v873 = vsel %vm870, %v852, %v862
      %v874 = vsel %vm870, %v853, %v863
      %v875 = vsel %vm870, %v854, %v864
      %v876 = vsel %vm870, %v855, %v865
      %v877 = vsel %vm870, %v856, %v866
      %v878 = vsel %vm870, %v857, %v867
      %v879 = vsel %vm870, %v858, %v868
      %v880 = vsel %vm870, %v859, %v869
      %v881 = vsel %vm870, %v860, %v850
      %v882 = vsel %vm870, %v861, %v851
      %v883 = vsel %vm870, %v862, %v852
      %v884 = vsel %vm870, %v863, %v853
      %v885 = vsel %vm870, %v864, %v854
      %v886 = vsel %vm870, %v865, %v855
      %v887 = vsel %vm870, %v866, %v856
      %v888 = vsel %vm870, %v867, %v857
      %v889 = vsel %vm870, %v868, %v858
      %v890 = vsel %vm870, %v869, %v859
      %v891 = vsel %vm848, 1, 0
      %v892 = vsel %vm849, 1, 0
      %vm893 = vcmp.eq.s32.totalorder %v891, 1
      %vm894 = vcmp.eq.s32.totalorder %v892, 1
      %v895 = vsel %vm893, %v881, 0.0
      %v896 = vsel %vm894, %v871, 0.0
      %v897 = vsel %vm893, %v882, 0.0
      %v898 = vsel %vm894, %v872, 0.0
      %v899 = vsel %vm893, %v883, 0.0
      %v900 = vsel %vm894, %v873, 0.0
      %v901 = vsel %vm893, %v884, 0.0
      %v902 = vsel %vm894, %v874, 0.0
      %v903 = vsel %vm893, %v885, 0.0
      %v904 = vsel %vm894, %v875, 0.0
      %v905 = vsel %vm893, %v886, 0.0
      %v906 = vsel %vm894, %v876, 0.0
      %v907 = vsel %vm893, %v887, 0.0
      %v908 = vsel %vm894, %v877, 0.0
      %v909 = vsel %vm893, %v888, 0.0
      %v910 = vsel %vm894, %v878, 0.0
      %v911 = vsel %vm893, %v889, 0.0
      %v912 = vsel %vm894, %v879, 0.0
      %v913 = vsel %vm893, %v890, 0.0
      %v914 = vsel %vm894, %v880, 0.0
      %vm915 = vcmp.lt.s32.totalorder %v846, 15
      %vm916 = vcmp.lt.s32.totalorder %v847, 15
      %v917 = vrot.slane %v825, 1
      %v918 = vrot.slane %v827, 1
      %v919 = vrot.slane %v829, 1
      %v920 = vrot.slane %v831, 1
      %v921 = vrot.slane %v833, 1
      %v922 = vrot.slane %v835, 1
      %v923 = vrot.slane %v837, 1
      %v924 = vrot.slane %v839, 1
      %v925 = vrot.slane %v841, 1
      %v926 = vrot.slane %v843, 1
      %v927 = vrot.slane %v826, 1
      %v928 = vrot.slane %v828, 1
      %v929 = vrot.slane %v830, 1
      %v930 = vrot.slane %v832, 1
      %v931 = vrot.slane %v834, 1
      %v932 = vrot.slane %v836, 1
      %v933 = vrot.slane %v838, 1
      %v934 = vrot.slane %v840, 1
      %v935 = vrot.slane %v842, 1
      %v936 = vrot.slane %v844, 1
      %vm937 = vcmp.lt.s32.totalorder %v846, 7
      %v938 = vsel %vm937, %v917, %v927
      %v939 = vsel %vm937, %v918, %v928
      %v940 = vsel %vm937, %v919, %v929
      %v941 = vsel %vm937, %v920, %v930
      %v942 = vsel %vm937, %v921, %v931
      %v943 = vsel %vm937, %v922, %v932
      %v944 = vsel %vm937, %v923, %v933
      %v945 = vsel %vm937, %v924, %v934
      %v946 = vsel %vm937, %v925, %v935
      %v947 = vsel %vm937, %v926, %v936
      %v948 = vsel %vm937, %v927, %v917
      %v949 = vsel %vm937, %v928, %v918
      %v950 = vsel %vm937, %v929, %v919
      %v951 = vsel %vm937, %v930, %v920
      %v952 = vsel %vm937, %v931, %v921
      %v953 = vsel %vm937, %v932, %v922
      %v954 = vsel %vm937, %v933, %v923
      %v955 = vsel %vm937, %v934, %v924
      %v956 = vsel %vm937, %v935, %v925
      %v957 = vsel %vm937, %v936, %v926
      %v958 = vsel %vm915, 1, 0
      %v959 = vsel %vm916, 1, 0
      %vm960 = vcmp.eq.s32.totalorder %v958, 1
      %vm961 = vcmp.eq.s32.totalorder %v959, 1
      %v962 = vsel %vm960, %v938, 0.0
      %v963 = vsel %vm961, %v948, 0.0
      %v964 = vsel %vm960, %v939, 0.0
      %v965 = vsel %vm961, %v949, 0.0
      %v966 = vsel %vm960, %v940, 0.0
      %v967 = vsel %vm961, %v950, 0.0
      %v968 = vsel %vm960, %v941, 0.0
      %v969 = vsel %vm961, %v951, 0.0
      %v970 = vsel %vm960, %v942, 0.0
      %v971 = vsel %vm961, %v952, 0.0
      %v972 = vsel %vm960, %v943, 0.0
      %v973 = vsel %vm961, %v953, 0.0
      %v974 = vsel %vm960, %v944, 0.0
      %v975 = vsel %vm961, %v954, 0.0
      %v976 = vsel %vm960, %v945, 0.0
      %v977 = vsel %vm961, %v955, 0.0
      %v978 = vsel %vm960, %v946, 0.0
      %v979 = vsel %vm961, %v956, 0.0
      %v980 = vsel %vm960, %v947, 0.0
      %v981 = vsel %vm961, %v957, 0.0
      %998 = vrot.lane.b32.xlu0 %v825, 2
      %v999 = vpop.permute.xlu0 %998
      %1000 = vrot.lane.b32.xlu0 %v826, 2
      %v1001 = vpop.permute.xlu0 %1000
      %1002 = vrot.lane.b32.xlu0 %v827, 2
      %v1003 = vpop.permute.xlu0 %1002
      %1004 = vrot.lane.b32.xlu0 %v828, 2
      %v1005 = vpop.permute.xlu0 %1004
      %1006 = vrot.lane.b32.xlu0 %v829, 2
      %v1007 = vpop.permute.xlu0 %1006
      %1008 = vrot.lane.b32.xlu0 %v830, 2
      %v1009 = vpop.permute.xlu0 %1008
      %1010 = vrot.lane.b32.xlu0 %v831, 2
      %v1011 = vpop.permute.xlu0 %1010
      %1012 = vrot.lane.b32.xlu0 %v832, 2
      %v1013 = vpop.permute.xlu0 %1012
      %1014 = vrot.lane.b32.xlu0 %v833, 2
      %v1015 = vpop.permute.xlu0 %1014
      %1016 = vrot.lane.b32.xlu0 %v834, 2
      %v1017 = vpop.permute.xlu0 %1016
      %1018 = vrot.lane.b32.xlu0 %v835, 2
      %v1019 = vpop.permute.xlu0 %1018
      %1020 = vrot.lane.b32.xlu0 %v836, 2
      %v1021 = vpop.permute.xlu0 %1020
      %1022 = vrot.lane.b32.xlu0 %v837, 2
      %v1023 = vpop.permute.xlu0 %1022
      %1024 = vrot.lane.b32.xlu0 %v838, 2
      %v1025 = vpop.permute.xlu0 %1024
      %1026 = vrot.lane.b32.xlu0 %v839, 2
      %v1027 = vpop.permute.xlu0 %1026
      %1028 = vrot.lane.b32.xlu0 %v840, 2
      %v1029 = vpop.permute.xlu0 %1028
      %1062 = vrot.lane.b32.xlu0 %v962, 4
      %v1063 = vpop.permute.xlu0 %1062
      %1064 = vrot.lane.b32.xlu0 %v963, 4
      %v1065 = vpop.permute.xlu0 %1064
      %1066 = vrot.lane.b32.xlu0 %v964, 4
      %v1067 = vpop.permute.xlu0 %1066
      %1068 = vrot.lane.b32.xlu0 %v965, 4
      %v1069 = vpop.permute.xlu0 %1068
      %1070 = vrot.lane.b32.xlu0 %v966, 4
      %v1071 = vpop.permute.xlu0 %1070
      %1072 = vrot.lane.b32.xlu0 %v967, 4
      %v1073 = vpop.permute.xlu0 %1072
      %1074 = vrot.lane.b32.xlu0 %v968, 4
      %v1075 = vpop.permute.xlu0 %1074
      %1076 = vrot.lane.b32.xlu0 %v969, 4
      %v1077 = vpop.permute.xlu0 %1076
      %1078 = vrot.lane.b32.xlu0 %v970, 4
      %v1079 = vpop.permute.xlu0 %1078
      %1080 = vrot.lane.b32.xlu0 %v971, 4
      %v1081 = vpop.permute.xlu0 %1080
      %1082 = vrot.lane.b32.xlu0 %v972, 4
      %v1083 = vpop.permute.xlu0 %1082
      %1084 = vrot.lane.b32.xlu0 %v973, 4
      %v1085 = vpop.permute.xlu0 %1084
      %1086 = vrot.lane.b32.xlu0 %v974, 4
      %v1087 = vpop.permute.xlu0 %1086
      %1088 = vrot.lane.b32.xlu0 %v975, 4
      %v1089 = vpop.permute.xlu0 %1088
      %1090 = vrot.lane.b32.xlu0 %v976, 4
      %v1091 = vpop.permute.xlu0 %1090
      %1092 = vrot.lane.b32.xlu0 %v977, 4
      %v1093 = vpop.permute.xlu0 %1092
      %1126 = vrot.lane.b32.xlu0 %v897, 6
      %v1127 = vpop.permute.xlu0 %1126
      %1128 = vrot.lane.b32.xlu0 %v898, 6
      %v1129 = vpop.permute.xlu0 %1128
      %1130 = vrot.lane.b32.xlu0 %v899, 6
      %v1131 = vpop.permute.xlu0 %1130
      %1132 = vrot.lane.b32.xlu0 %v900, 6
      %v1133 = vpop.permute.xlu0 %1132
      %1134 = vrot.lane.b32.xlu0 %v901, 6
      %v1135 = vpop.permute.xlu0 %1134
      %1136 = vrot.lane.b32.xlu0 %v902, 6
      %v1137 = vpop.permute.xlu0 %1136
      %1138 = vrot.lane.b32.xlu0 %v903, 6
      %v1139 = vpop.permute.xlu0 %1138
      %1140 = vrot.lane.b32.xlu0 %v904, 6
      %v1141 = vpop.permute.xlu0 %1140
      %1142 = vrot.lane.b32.xlu0 %v905, 6
      %v1143 = vpop.permute.xlu0 %1142
      %1144 = vrot.lane.b32.xlu0 %v906, 6
      %v1145 = vpop.permute.xlu0 %1144
      %1146 = vrot.lane.b32.xlu0 %v907, 6
      %v1147 = vpop.permute.xlu0 %1146
      %1148 = vrot.lane.b32.xlu0 %v908, 6
      %v1149 = vpop.permute.xlu0 %1148
      %1150 = vrot.lane.b32.xlu0 %v909, 6
      %v1151 = vpop.permute.xlu0 %1150
      %1152 = vrot.lane.b32.xlu0 %v910, 6
      %v1153 = vpop.permute.xlu0 %1152
      %1154 = vrot.lane.b32.xlu0 %v911, 6
      %v1155 = vpop.permute.xlu0 %1154
      %1156 = vrot.lane.b32.xlu0 %v912, 6
      %v1157 = vpop.permute.xlu0 %1156
      %1176 = vrot.lane.b32.xlu0 %v827, 8
      %v1177 = vpop.permute.xlu0 %1176
      %1178 = vrot.lane.b32.xlu0 %v828, 8
      %v1179 = vpop.permute.xlu0 %1178
      %1180 = vrot.lane.b32.xlu0 %v829, 8
      %v1181 = vpop.permute.xlu0 %1180
      %1182 = vrot.lane.b32.xlu0 %v830, 8
      %v1183 = vpop.permute.xlu0 %1182
      %1184 = vrot.lane.b32.xlu0 %v831, 8
      %v1185 = vpop.permute.xlu0 %1184
      %1186 = vrot.lane.b32.xlu0 %v832, 8
      %v1187 = vpop.permute.xlu0 %1186
      %1188 = vrot.lane.b32.xlu0 %v833, 8
      %v1189 = vpop.permute.xlu0 %1188
      %1190 = vrot.lane.b32.xlu0 %v834, 8
      %v1191 = vpop.permute.xlu0 %1190
      %1192 = vrot.lane.b32.xlu0 %v835, 8
      %v1193 = vpop.permute.xlu0 %1192
      %1194 = vrot.lane.b32.xlu0 %v836, 8
      %v1195 = vpop.permute.xlu0 %1194
      %1196 = vrot.lane.b32.xlu0 %v837, 8
      %v1197 = vpop.permute.xlu0 %1196
      %1198 = vrot.lane.b32.xlu0 %v838, 8
      %v1199 = vpop.permute.xlu0 %1198
      %1200 = vrot.lane.b32.xlu0 %v839, 8
      %v1201 = vpop.permute.xlu0 %1200
      %1202 = vrot.lane.b32.xlu0 %v840, 8
      %v1203 = vpop.permute.xlu0 %1202
      %1204 = vrot.lane.b32.xlu0 %v841, 8
      %v1205 = vpop.permute.xlu0 %1204
      %1206 = vrot.lane.b32.xlu0 %v842, 8
      %v1207 = vpop.permute.xlu0 %1206
      %1226 = vrot.lane.b32.xlu0 %v964, 10
      %v1227 = vpop.permute.xlu0 %1226
      %1228 = vrot.lane.b32.xlu0 %v965, 10
      %v1229 = vpop.permute.xlu0 %1228
      %1230 = vrot.lane.b32.xlu0 %v966, 10
      %v1231 = vpop.permute.xlu0 %1230
      %1232 = vrot.lane.b32.xlu0 %v967, 10
      %v1233 = vpop.permute.xlu0 %1232
      %1234 = vrot.lane.b32.xlu0 %v968, 10
      %v1235 = vpop.permute.xlu0 %1234
      %1236 = vrot.lane.b32.xlu0 %v969, 10
      %v1237 = vpop.permute.xlu0 %1236
      %1238 = vrot.lane.b32.xlu0 %v970, 10
      %v1239 = vpop.permute.xlu0 %1238
      %1240 = vrot.lane.b32.xlu0 %v971, 10
      %v1241 = vpop.permute.xlu0 %1240
      %1242 = vrot.lane.b32.xlu0 %v972, 10
      %v1243 = vpop.permute.xlu0 %1242
      %1244 = vrot.lane.b32.xlu0 %v973, 10
      %v1245 = vpop.permute.xlu0 %1244
      %1246 = vrot.lane.b32.xlu0 %v974, 10
      %v1247 = vpop.permute.xlu0 %1246
      %1248 = vrot.lane.b32.xlu0 %v975, 10
      %v1249 = vpop.permute.xlu0 %1248
      %1250 = vrot.lane.b32.xlu0 %v976, 10
      %v1251 = vpop.permute.xlu0 %1250
      %1252 = vrot.lane.b32.xlu0 %v977, 10
      %v1253 = vpop.permute.xlu0 %1252
      %1254 = vrot.lane.b32.xlu0 %v978, 10
      %v1255 = vpop.permute.xlu0 %1254
      %1256 = vrot.lane.b32.xlu0 %v979, 10
      %v1257 = vpop.permute.xlu0 %1256
      %1276 = vrot.lane.b32.xlu0 %v899, 12
      %v1277 = vpop.permute.xlu0 %1276
      %1278 = vrot.lane.b32.xlu0 %v900, 12
      %v1279 = vpop.permute.xlu0 %1278
      %1280 = vrot.lane.b32.xlu0 %v901, 12
      %v1281 = vpop.permute.xlu0 %1280
      %1282 = vrot.lane.b32.xlu0 %v902, 12
      %v1283 = vpop.permute.xlu0 %1282
      %1284 = vrot.lane.b32.xlu0 %v903, 12
      %v1285 = vpop.permute.xlu0 %1284
      %1286 = vrot.lane.b32.xlu0 %v904, 12
      %v1287 = vpop.permute.xlu0 %1286
      %1288 = vrot.lane.b32.xlu0 %v905, 12
      %v1289 = vpop.permute.xlu0 %1288
      %1290 = vrot.lane.b32.xlu0 %v906, 12
      %v1291 = vpop.permute.xlu0 %1290
      %1292 = vrot.lane.b32.xlu0 %v907, 12
      %v1293 = vpop.permute.xlu0 %1292
      %1294 = vrot.lane.b32.xlu0 %v908, 12
      %v1295 = vpop.permute.xlu0 %1294
      %1296 = vrot.lane.b32.xlu0 %v909, 12
      %v1297 = vpop.permute.xlu0 %1296
      %1298 = vrot.lane.b32.xlu0 %v910, 12
      %v1299 = vpop.permute.xlu0 %1298
      %1300 = vrot.lane.b32.xlu0 %v911, 12
      %v1301 = vpop.permute.xlu0 %1300
      %1302 = vrot.lane.b32.xlu0 %v912, 12
      %v1303 = vpop.permute.xlu0 %1302
      %1304 = vrot.lane.b32.xlu0 %v913, 12
      %v1305 = vpop.permute.xlu0 %1304
      %1306 = vrot.lane.b32.xlu0 %v914, 12
      %v1307 = vpop.permute.xlu0 %1306
      %1326 = vrot.lane.b32.xlu0 %v829, 14
      %v1327 = vpop.permute.xlu0 %1326
      %1328 = vrot.lane.b32.xlu0 %v830, 14
      %v1329 = vpop.permute.xlu0 %1328
      %1330 = vrot.lane.b32.xlu0 %v831, 14
      %v1331 = vpop.permute.xlu0 %1330
      %1332 = vrot.lane.b32.xlu0 %v832, 14
      %v1333 = vpop.permute.xlu0 %1332
      %1334 = vrot.lane.b32.xlu0 %v833, 14
      %v1335 = vpop.permute.xlu0 %1334
      %1336 = vrot.lane.b32.xlu0 %v834, 14
      %v1337 = vpop.permute.xlu0 %1336
      %1338 = vrot.lane.b32.xlu0 %v835, 14
      %v1339 = vpop.permute.xlu0 %1338
      %1340 = vrot.lane.b32.xlu0 %v836, 14
      %v1341 = vpop.permute.xlu0 %1340
      %1342 = vrot.lane.b32.xlu0 %v837, 14
      %v1343 = vpop.permute.xlu0 %1342
      %1344 = vrot.lane.b32.xlu0 %v838, 14
      %v1345 = vpop.permute.xlu0 %1344
      %1346 = vrot.lane.b32.xlu0 %v839, 14
      %v1347 = vpop.permute.xlu0 %1346
      %1348 = vrot.lane.b32.xlu0 %v840, 14
      %v1349 = vpop.permute.xlu0 %1348
      %1350 = vrot.lane.b32.xlu0 %v841, 14
      %v1351 = vpop.permute.xlu0 %1350
      %1352 = vrot.lane.b32.xlu0 %v842, 14
      %v1353 = vpop.permute.xlu0 %1352
      %1354 = vrot.lane.b32.xlu0 %v843, 14
      %v1355 = vpop.permute.xlu0 %1354
      %1356 = vrot.lane.b32.xlu0 %v844, 14
      %v1357 = vpop.permute.xlu0 %1356
      %1376 = vrot.lane.b32.xlu0 %v966, 16
      %v1377 = vpop.permute.xlu0 %1376
      %1378 = vrot.lane.b32.xlu0 %v967, 16
      %v1379 = vpop.permute.xlu0 %1378
      %1380 = vrot.lane.b32.xlu0 %v968, 16
      %v1381 = vpop.permute.xlu0 %1380
      %1382 = vrot.lane.b32.xlu0 %v969, 16
      %v1383 = vpop.permute.xlu0 %1382
      %1384 = vrot.lane.b32.xlu0 %v970, 16
      %v1385 = vpop.permute.xlu0 %1384
      %1386 = vrot.lane.b32.xlu0 %v971, 16
      %v1387 = vpop.permute.xlu0 %1386
      %1388 = vrot.lane.b32.xlu0 %v972, 16
      %v1389 = vpop.permute.xlu0 %1388
      %1390 = vrot.lane.b32.xlu0 %v973, 16
      %v1391 = vpop.permute.xlu0 %1390
      %1392 = vrot.lane.b32.xlu0 %v974, 16
      %v1393 = vpop.permute.xlu0 %1392
      %1394 = vrot.lane.b32.xlu0 %v975, 16
      %v1395 = vpop.permute.xlu0 %1394
      %1396 = vrot.lane.b32.xlu0 %v976, 16
      %v1397 = vpop.permute.xlu0 %1396
      %1398 = vrot.lane.b32.xlu0 %v977, 16
      %v1399 = vpop.permute.xlu0 %1398
      %1400 = vrot.lane.b32.xlu0 %v978, 16
      %v1401 = vpop.permute.xlu0 %1400
      %1402 = vrot.lane.b32.xlu0 %v979, 16
      %v1403 = vpop.permute.xlu0 %1402
      %1404 = vrot.lane.b32.xlu0 %v980, 16
      %v1405 = vpop.permute.xlu0 %1404
      %1406 = vrot.lane.b32.xlu0 %v981, 16
      %v1407 = vpop.permute.xlu0 %1406
      %vm1424 = vcmask 15360
      %v1425 = vsel %vm1424, %v895, %v999
      %v1426 = vsel %vm1424, %v896, %v1001
      %v1427 = vsel %vm1424, %v897, %v1003
      %v1428 = vsel %vm1424, %v898, %v1005
      %v1429 = vsel %vm1424, %v899, %v1007
      %v1430 = vsel %vm1424, %v900, %v1009
      %v1431 = vsel %vm1424, %v901, %v1011
      %v1432 = vsel %vm1424, %v902, %v1013
      %v1433 = vsel %vm1424, %v903, %v1015
      %v1434 = vsel %vm1424, %v904, %v1017
      %v1435 = vsel %vm1424, %v905, %v1019
      %v1436 = vsel %vm1424, %v906, %v1021
      %v1437 = vsel %vm1424, %v907, %v1023
      %v1438 = vsel %vm1424, %v908, %v1025
      %v1439 = vsel %vm1424, %v909, %v1027
      %v1440 = vsel %vm1424, %v910, %v1029
      %v1441 = vsel %vm468, %v1425, %v1063
      %v1442 = vsel %vm468, %v1426, %v1065
      %v1443 = vsel %vm468, %v1427, %v1067
      %v1444 = vsel %vm468, %v1428, %v1069
      %v1445 = vsel %vm468, %v1429, %v1071
      %v1446 = vsel %vm468, %v1430, %v1073
      %v1447 = vsel %vm468, %v1431, %v1075
      %v1448 = vsel %vm468, %v1432, %v1077
      %v1449 = vsel %vm468, %v1433, %v1079
      %v1450 = vsel %vm468, %v1434, %v1081
      %v1451 = vsel %vm468, %v1435, %v1083
      %v1452 = vsel %vm468, %v1436, %v1085
      %v1453 = vsel %vm468, %v1437, %v1087
      %v1454 = vsel %vm468, %v1438, %v1089
      %v1455 = vsel %vm468, %v1439, %v1091
      %v1456 = vsel %vm468, %v1440, %v1093
      %vm1457 = vcmask 48128
      %v1458 = vsel %vm1457, %v1441, %v1127
      %v1459 = vsel %vm1457, %v1442, %v1129
      %v1460 = vsel %vm1457, %v1443, %v1131
      %v1461 = vsel %vm1457, %v1444, %v1133
      %v1462 = vsel %vm1457, %v1445, %v1135
      %v1463 = vsel %vm1457, %v1446, %v1137
      %v1464 = vsel %vm1457, %v1447, %v1139
      %v1465 = vsel %vm1457, %v1448, %v1141
      %v1466 = vsel %vm1457, %v1449, %v1143
      %v1467 = vsel %vm1457, %v1450, %v1145
      %v1468 = vsel %vm1457, %v1451, %v1147
      %v1469 = vsel %vm1457, %v1452, %v1149
      %v1470 = vsel %vm1457, %v1453, %v1151
      %v1471 = vsel %vm1457, %v1454, %v1153
      %v1472 = vsel %vm1457, %v1455, %v1155
      %v1473 = vsel %vm1457, %v1456, %v1157
      %vm1474 = vcmask 64512
      %v1475 = vsel %vm1474, %v1458, %v1177
      %v1476 = vsel %vm1474, %v1459, %v1179
      %v1477 = vsel %vm1474, %v1460, %v1181
      %v1478 = vsel %vm1474, %v1461, %v1183
      %v1479 = vsel %vm1474, %v1462, %v1185
      %v1480 = vsel %vm1474, %v1463, %v1187
      %v1481 = vsel %vm1474, %v1464, %v1189
      %v1482 = vsel %vm1474, %v1465, %v1191
      %v1483 = vsel %vm1474, %v1466, %v1193
      %v1484 = vsel %vm1474, %v1467, %v1195
      %v1485 = vsel %vm1474, %v1468, %v1197
      %v1486 = vsel %vm1474, %v1469, %v1199
      %v1487 = vsel %vm1474, %v1470, %v1201
      %v1488 = vsel %vm1474, %v1471, %v1203
      %v1489 = vsel %vm1474, %v1472, %v1205
      %v1490 = vsel %vm1474, %v1473, %v1207
      %vm1491 = vcmask 80896
      %v1492 = vsel %vm1491, %v1475, %v1227
      %v1493 = vsel %vm1491, %v1476, %v1229
      %v1494 = vsel %vm1491, %v1477, %v1231
      %v1495 = vsel %vm1491, %v1478, %v1233
      %v1496 = vsel %vm1491, %v1479, %v1235
      %v1497 = vsel %vm1491, %v1480, %v1237
      %v1498 = vsel %vm1491, %v1481, %v1239
      %v1499 = vsel %vm1491, %v1482, %v1241
      %v1500 = vsel %vm1491, %v1483, %v1243
      %v1501 = vsel %vm1491, %v1484, %v1245
      %v1502 = vsel %vm1491, %v1485, %v1247
      %v1503 = vsel %vm1491, %v1486, %v1249
      %v1504 = vsel %vm1491, %v1487, %v1251
      %v1505 = vsel %vm1491, %v1488, %v1253
      %v1506 = vsel %vm1491, %v1489, %v1255
      %v1507 = vsel %vm1491, %v1490, %v1257
      %vm1508 = vcmask 97280
      %v1509 = vsel %vm1508, %v1492, %v1277
      %v1510 = vsel %vm1508, %v1493, %v1279
      %v1511 = vsel %vm1508, %v1494, %v1281
      %v1512 = vsel %vm1508, %v1495, %v1283
      %v1513 = vsel %vm1508, %v1496, %v1285
      %v1514 = vsel %vm1508, %v1497, %v1287
      %v1515 = vsel %vm1508, %v1498, %v1289
      %v1516 = vsel %vm1508, %v1499, %v1291
      %v1517 = vsel %vm1508, %v1500, %v1293
      %v1518 = vsel %vm1508, %v1501, %v1295
      %v1519 = vsel %vm1508, %v1502, %v1297
      %v1520 = vsel %vm1508, %v1503, %v1299
      %v1521 = vsel %vm1508, %v1504, %v1301
      %v1522 = vsel %vm1508, %v1505, %v1303
      %v1523 = vsel %vm1508, %v1506, %v1305
      %v1524 = vsel %vm1508, %v1507, %v1307
      %vm1525 = vcmask 113664
      %v1526 = vsel %vm1525, %v1509, %v1327
      %v1527 = vsel %vm1525, %v1510, %v1329
      %v1528 = vsel %vm1525, %v1511, %v1331
      %v1529 = vsel %vm1525, %v1512, %v1333
      %v1530 = vsel %vm1525, %v1513, %v1335
      %v1531 = vsel %vm1525, %v1514, %v1337
      %v1532 = vsel %vm1525, %v1515, %v1339
      %v1533 = vsel %vm1525, %v1516, %v1341
      %v1534 = vsel %vm1525, %v1517, %v1343
      %v1535 = vsel %vm1525, %v1518, %v1345
      %v1536 = vsel %vm1525, %v1519, %v1347
      %v1537 = vsel %vm1525, %v1520, %v1349
      %v1538 = vsel %vm1525, %v1521, %v1351
      %v1539 = vsel %vm1525, %v1522, %v1353
      %v1540 = vsel %vm1525, %v1523, %v1355
      %v1541 = vsel %vm1525, %v1524, %v1357
      %vm1542 = vcmask 130048
      %v1543 = vsel %vm1542, %v1526, %v1377
      %v1544 = vsel %vm1542, %v1527, %v1379
      %v1545 = vsel %vm1542, %v1528, %v1381
      %v1546 = vsel %vm1542, %v1529, %v1383
      %v1547 = vsel %vm1542, %v1530, %v1385
      %v1548 = vsel %vm1542, %v1531, %v1387
      %v1549 = vsel %vm1542, %v1532, %v1389
      %v1550 = vsel %vm1542, %v1533, %v1391
      %v1551 = vsel %vm1542, %v1534, %v1393
      %v1552 = vsel %vm1542, %v1535, %v1395
      %v1553 = vsel %vm1542, %v1536, %v1397
      %v1554 = vsel %vm1542, %v1537, %v1399
      %v1555 = vsel %vm1542, %v1538, %v1401
      %v1556 = vsel %vm1542, %v1539, %v1403
      %v1557 = vsel %vm1542, %v1540, %v1405
      %v1558 = vsel %vm1542, %v1541, %v1407
      %v1559 = vld [vmem:[%s5] sm:$0xff]
      %v1560 = vld [vmem:[%s5 + $0x8] sm:$0xff]
      %v1561 = vld [vmem:[%s5 + $0x10] sm:$0x3]
      %vm1562 = vcmask 146432
      %v1564 = vsel %vm1562, %v1543, 0
      %v1567 = vsel %vm1562, %v1544, 0
      %v1570 = vsel %vm1562, %v1545, 0
      %v1573 = vsel %vm1562, %v1546, 0
      %v1576 = vsel %vm1562, %v1547, 0
      %v1579 = vsel %vm1562, %v1548, 0
      %v1582 = vsel %vm1562, %v1549, 0
      %v1585 = vsel %vm1562, %v1550, 0
      %v1588 = vsel %vm1562, %v1551, 0
      %v1591 = vsel %vm1562, %v1552, 0
      %v1594 = vsel %vm1562, %v1553, 0
      %v1597 = vsel %vm1562, %v1554, 0
      %v1600 = vsel %vm1562, %v1555, 0
      %v1603 = vsel %vm1562, %v1556, 0
      %v1606 = vsel %vm1562, %v1557, 0
      %v1609 = vsel %vm1562, %v1558, 0
      %vm1611 = vcmask 1041408
      %v1613 = vsel %vm1611, %v1561, 0
      %1615 = vmatprep.subr.mxu0 0.0
      %1616 = vmatpush1.msra.mxu0 0.0
      %1617 = vmatprep.subr.mxu0 0.0
      %1618 = vmatpush1.msra.mxu0 0.0
      %1619 = vmatprep.subr.mxu0 0.0
      %1620 = vmatpush1.msra.mxu0 0.0
      %1621 = vmatprep.subr.mxu0 0.0
      %1622 = vmatpush1.msra.mxu0 0.0
      %1623 = vmatprep.subr.mxu0 0.0
      %1624 = vmatpush1.msra.mxu0 0.0
      %1625 = vmatprep.subr.mxu0 0.0
      %1626 = vmatpush1.msra.mxu0 0.0
      %1627 = vmatprep.subr.mxu0 0.0
      %1628 = vmatpush1.msra.mxu0 0.0
      %1629 = vmatprep.subr.mxu0 0.0
      %1630 = vmatpush1.msra.mxu0 0.0
      %1631 = vmatprep.subr.mxu0 0.0
      %1632 = vmatpush1.msra.mxu0 0.0
      %1633 = vmatprep.subr.mxu0 0.0
      %1634 = vmatpush1.msra.mxu0 0.0
      %1635 = vmatprep.subr.mxu0 0.0
      %1636 = vmatpush1.msra.mxu0 0.0
      %1637 = vmatprep.subr.mxu0 0.0
      %1638 = vmatpush1.msra.mxu0 0.0
      %1639 = vmatprep.subr.mxu0 0.0
      %1640 = vmatpush1.msra.mxu0 0.0
      %1641 = vmatprep.subr.mxu0 0.0
      %1642 = vmatpush1.msra.mxu0 %v1613
      %1643 = vmatprep.subr.mxu0 0.0
      %1644 = vmatpush1.msra.mxu0 %v1560
      %1645 = vmatprep.subr.mxu0 0.0
      %1646 = vmatpush1.msra.mxu0 %v1559
      %1647 = vmatprep.subr.mxu0 0.0
      %1648 = vmatpush2.msra.mxu0 0.0
      %1649 = vmatprep.subr.mxu0 0.0
      %1650 = vmatpush2.msra.mxu0 0.0
      %1651 = vmatprep.subr.mxu0 0.0
      %1652 = vmatpush2.msra.mxu0 0.0
      %1653 = vmatprep.subr.mxu0 0.0
      %1654 = vmatpush2.msra.mxu0 0.0
      %1655 = vmatprep.subr.mxu0 0.0
      %1656 = vmatpush2.msra.mxu0 0.0
      %1657 = vmatprep.subr.mxu0 0.0
      %1658 = vmatpush2.msra.mxu0 0.0
      %1659 = vmatprep.subr.mxu0 0.0
      %1660 = vmatpush2.msra.mxu0 0.0
      %1661 = vmatprep.subr.mxu0 0.0
      %1662 = vmatpush2.msra.mxu0 0.0
      %1663 = vmatprep.subr.mxu0 0.0
      %1664 = vmatpush2.msra.mxu0 0.0
      %1665 = vmatprep.subr.mxu0 0.0
      %1666 = vmatpush2.msra.mxu0 0.0
      %1667 = vmatprep.subr.mxu0 0.0
      %1668 = vmatpush2.msra.mxu0 0.0
      %1669 = vmatprep.subr.mxu0 0.0
      %1670 = vmatpush2.msra.mxu0 0.0
      %1671 = vmatprep.subr.mxu0 0.0
      %1672 = vmatpush2.msra.mxu0 0.0
      %1673 = vmatprep.subr.mxu0 0.0
      %1674 = vmatpush2.msra.mxu0 0.0
      %1675 = vmatprep.subr.mxu0 0.0
      %1676 = vmatpush2.msra.mxu0 0.0
      %1677 = vmatprep.subr.mxu0 0.0
      %1678 = vmatpush2.msra.mxu0 0.0
      %1679 = vmatprep.mubr.f32.mxu0 0.0
      %1680 = vmatmul.mubr.f32.gmra.mxu0 %v1564
      %v1681 = vpop.f32.mrf.mxu0
      %v1682 = vadd.f32 0.0, %v1681
      %v1683 = vpop.f32.mrf.mxu0
      %1684 = vmatprep.mubr.f32.mxu0 0.0
      %1685 = vmatmul.mubr.f32.gmra.mxu0 %v1567
      %v1686 = vpop.f32.mrf.mxu0
      %v1687 = vadd.f32 0.0, %v1686
      %v1688 = vpop.f32.mrf.mxu0
      %1689 = vmatprep.mubr.f32.mxu0 0.0
      %1690 = vmatmul.mubr.f32.gmra.mxu0 %v1570
      %v1691 = vpop.f32.mrf.mxu0
      %v1692 = vadd.f32 0.0, %v1691
      %v1693 = vpop.f32.mrf.mxu0
      %1694 = vmatprep.mubr.f32.mxu0 0.0
      %1695 = vmatmul.mubr.f32.gmra.mxu0 %v1573
      %v1696 = vpop.f32.mrf.mxu0
      %v1697 = vadd.f32 0.0, %v1696
      %v1698 = vpop.f32.mrf.mxu0
      %1699 = vmatprep.mubr.f32.mxu0 0.0
      %1700 = vmatmul.mubr.f32.gmra.mxu0 %v1576
      %v1701 = vpop.f32.mrf.mxu0
      %v1702 = vadd.f32 0.0, %v1701
      %v1703 = vpop.f32.mrf.mxu0
      %1704 = vmatprep.mubr.f32.mxu0 0.0
      %1705 = vmatmul.mubr.f32.gmra.mxu0 %v1579
      %v1706 = vpop.f32.mrf.mxu0
      %v1707 = vadd.f32 0.0, %v1706
      %v1708 = vpop.f32.mrf.mxu0
      %1709 = vmatprep.mubr.f32.mxu0 0.0
      %1710 = vmatmul.mubr.f32.gmra.mxu0 %v1582
      %v1711 = vpop.f32.mrf.mxu0
      %v1712 = vadd.f32 0.0, %v1711
      %v1713 = vpop.f32.mrf.mxu0
      %1714 = vmatprep.mubr.f32.mxu0 0.0
      %1715 = vmatmul.mubr.f32.gmra.mxu0 %v1585
      %v1716 = vpop.f32.mrf.mxu0
      %v1717 = vadd.f32 0.0, %v1716
      %v1718 = vpop.f32.mrf.mxu0
      %1719 = vmatprep.mubr.f32.mxu0 0.0
      %1720 = vmatmul.mubr.f32.gmra.mxu0 %v1588
      %v1721 = vpop.f32.mrf.mxu0
      %v1722 = vadd.f32 0.0, %v1721
      %v1723 = vpop.f32.mrf.mxu0
      %1724 = vmatprep.mubr.f32.mxu0 0.0
      %1725 = vmatmul.mubr.f32.gmra.mxu0 %v1591
      %v1726 = vpop.f32.mrf.mxu0
      %v1727 = vadd.f32 0.0, %v1726
      %v1728 = vpop.f32.mrf.mxu0
      %1729 = vmatprep.mubr.f32.mxu0 0.0
      %1730 = vmatmul.mubr.f32.gmra.mxu0 %v1594
      %v1731 = vpop.f32.mrf.mxu0
      %v1732 = vadd.f32 0.0, %v1731
      %v1733 = vpop.f32.mrf.mxu0
      %1734 = vmatprep.mubr.f32.mxu0 0.0
      %1735 = vmatmul.mubr.f32.gmra.mxu0 %v1597
      %v1736 = vpop.f32.mrf.mxu0
      %v1737 = vadd.f32 0.0, %v1736
      %v1738 = vpop.f32.mrf.mxu0
      %1739 = vmatprep.mubr.f32.mxu0 0.0
      %1740 = vmatmul.mubr.f32.gmra.mxu0 %v1600
      %v1741 = vpop.f32.mrf.mxu0
      %v1742 = vadd.f32 0.0, %v1741
      %v1743 = vpop.f32.mrf.mxu0
      %1744 = vmatprep.mubr.f32.mxu0 0.0
      %1745 = vmatmul.mubr.f32.gmra.mxu0 %v1603
      %v1746 = vpop.f32.mrf.mxu0
      %v1747 = vadd.f32 0.0, %v1746
      %v1748 = vpop.f32.mrf.mxu0
      %1749 = vmatprep.mubr.f32.mxu0 0.0
      %1750 = vmatmul.mubr.f32.gmra.mxu0 %v1606
      %v1751 = vpop.f32.mrf.mxu0
      %v1752 = vadd.f32 0.0, %v1751
      %v1753 = vpop.f32.mrf.mxu0
      %1754 = vmatprep.mubr.f32.mxu0 0.0
      %1755 = vmatmul.mubr.f32.gmra.mxu0 %v1609
      %v1756 = vpop.f32.mrf.mxu0
      %v1757 = vadd.f32 0.0, %v1756
      %v1758 = vpop.f32.mrf.mxu0
      %1759 = vdwg.mxu0
      %v1760 = vld [vmem:[%s6] sm:$0x1]
      %v1762 = vlaneseq
      %v1763 = vshrl.u32 %v1762, 7
      %v1764 = vsub.s32 0, %v1763
      %v1765 = vrot.slane %v1760, %v1764
      %v1767 = vmul.f32 %v1682, %v1765
      %v1768 = vmul.f32 %v1687, %v1765
      %v1769 = vmul.f32 %v1692, %v1765
      %v1770 = vmul.f32 %v1697, %v1765
      %v1771 = vmul.f32 %v1702, %v1765
      %v1772 = vmul.f32 %v1707, %v1765
      %v1773 = vmul.f32 %v1712, %v1765
      %v1774 = vmul.f32 %v1717, %v1765
      %v1775 = vmul.f32 %v1722, %v1765
      %v1776 = vmul.f32 %v1727, %v1765
      %v1777 = vmul.f32 %v1732, %v1765
      %v1778 = vmul.f32 %v1737, %v1765
      %v1779 = vmul.f32 %v1742, %v1765
      %v1780 = vmul.f32 %v1747, %v1765
      %v1781 = vmul.f32 %v1752, %v1765
      %v1782 = vmul.f32 %v1757, %v1765
      %s1783 = scalar_lea.vmem %s6, 1
      %v1784 = vld [vmem:[%s1783] sm:$0x1]
      %v1786 = vlaneseq
      %v1787 = vshrl.u32 %v1786, 7
      %v1788 = vsub.s32 0, %v1787
      %v1789 = vrot.slane %v1784, %v1788
      %v1791 = vadd.f32 %v1767, %v1789
      %v1792 = vadd.f32 %v1768, %v1789
      %v1793 = vadd.f32 %v1769, %v1789
      %v1794 = vadd.f32 %v1770, %v1789
      %v1795 = vadd.f32 %v1771, %v1789
      %v1796 = vadd.f32 %v1772, %v1789
      %v1797 = vadd.f32 %v1773, %v1789
      %v1798 = vadd.f32 %v1774, %v1789
      %v1799 = vadd.f32 %v1775, %v1789
      %v1800 = vadd.f32 %v1776, %v1789
      %v1801 = vadd.f32 %v1777, %v1789
      %v1802 = vadd.f32 %v1778, %v1789
      %v1803 = vadd.f32 %v1779, %v1789
      %v1804 = vadd.f32 %v1780, %v1789
      %v1805 = vadd.f32 %v1781, %v1789
      %v1806 = vadd.f32 %v1782, %v1789
      %vm1807 = vcmp.gt.f32.partialorder %v1791, 0.0
      %vm1808 = vcmp.gt.f32.partialorder %v1792, 0.0
      %vm1809 = vcmp.gt.f32.partialorder %v1793, 0.0
      %vm1810 = vcmp.gt.f32.partialorder %v1794, 0.0
      %vm1811 = vcmp.gt.f32.partialorder %v1795, 0.0
      %vm1812 = vcmp.gt.f32.partialorder %v1796, 0.0
      %vm1813 = vcmp.gt.f32.partialorder %v1797, 0.0
      %vm1814 = vcmp.gt.f32.partialorder %v1798, 0.0
      %vm1815 = vcmp.gt.f32.partialorder %v1799, 0.0
      %vm1816 = vcmp.gt.f32.partialorder %v1800, 0.0
      %vm1817 = vcmp.gt.f32.partialorder %v1801, 0.0
      %vm1818 = vcmp.gt.f32.partialorder %v1802, 0.0
      %vm1819 = vcmp.gt.f32.partialorder %v1803, 0.0
      %vm1820 = vcmp.gt.f32.partialorder %v1804, 0.0
      %vm1821 = vcmp.gt.f32.partialorder %v1805, 0.0
      %vm1822 = vcmp.gt.f32.partialorder %v1806, 0.0
      %v1823 = vmul.f32 %v1791, 0.1
      %v1824 = vmul.f32 %v1792, 0.1
      %v1825 = vmul.f32 %v1793, 0.1
      %v1826 = vmul.f32 %v1794, 0.1
      %v1827 = vmul.f32 %v1795, 0.1
      %v1828 = vmul.f32 %v1796, 0.1
      %v1829 = vmul.f32 %v1797, 0.1
      %v1830 = vmul.f32 %v1798, 0.1
      %v1831 = vmul.f32 %v1799, 0.1
      %v1832 = vmul.f32 %v1800, 0.1
      %v1833 = vmul.f32 %v1801, 0.1
      %v1834 = vmul.f32 %v1802, 0.1
      %v1835 = vmul.f32 %v1803, 0.1
      %v1836 = vmul.f32 %v1804, 0.1
      %v1837 = vmul.f32 %v1805, 0.1
      %v1838 = vmul.f32 %v1806, 0.1
      %v1839 = vsel %vm1807, %v1791, %v1823
      %v1840 = vsel %vm1808, %v1792, %v1824
      %v1841 = vsel %vm1809, %v1793, %v1825
      %v1842 = vsel %vm1810, %v1794, %v1826
      %v1843 = vsel %vm1811, %v1795, %v1827
      %v1844 = vsel %vm1812, %v1796, %v1828
      %v1845 = vsel %vm1813, %v1797, %v1829
      %v1846 = vsel %vm1814, %v1798, %v1830
      %v1847 = vsel %vm1815, %v1799, %v1831
      %v1848 = vsel %vm1816, %v1800, %v1832
      %v1849 = vsel %vm1817, %v1801, %v1833
      %v1850 = vsel %vm1818, %v1802, %v1834
      %v1851 = vsel %vm1819, %v1803, %v1835
      %v1852 = vsel %vm1820, %v1804, %v1836
      %v1853 = vsel %vm1821, %v1805, %v1837
      %v1854 = vsel %vm1822, %v1806, %v1838
      %v1855 = vadd.f32 %v1839, %v447
      %v1856 = vadd.f32 %v1840, %v448
      %v1857 = vadd.f32 %v1841, %v449
      %v1858 = vadd.f32 %v1842, %v450
      %v1859 = vadd.f32 %v1843, %v451
      %v1860 = vadd.f32 %v1844, %v452
      %v1861 = vadd.f32 %v1845, %v453
      %v1862 = vadd.f32 %v1846, %v454
      %v1863 = vadd.f32 %v1847, %v455
      %v1864 = vadd.f32 %v1848, %v456
      %v1865 = vadd.f32 %v1849, %v457
      %v1866 = vadd.f32 %v1850, %v458
      %v1867 = vadd.f32 %v1851, %v459
      %v1868 = vadd.f32 %v1852, %v460
      %v1869 = vadd.f32 %v1853, %v461
      %v1870 = vadd.f32 %v1854, %v462
      %1871 = vst.msk [vmem:[%s445] sm:$0xff] %vm468, %v1855
      %1872 = vst.msk [vmem:[%s445 + $0x8] sm:$0xff] %vm468, %v1856
      %1873 = vst.msk [vmem:[%s445 + $0x10] sm:$0xff] %vm468, %v1857
      %1874 = vst.msk [vmem:[%s445 + $0x18] sm:$0xff] %vm468, %v1858
      %1875 = vst.msk [vmem:[%s445 + $0x20] sm:$0xff] %vm468, %v1859
      %1876 = vst.msk [vmem:[%s445 + $0x28] sm:$0xff] %vm468, %v1860
      %1877 = vst.msk [vmem:[%s445 + $0x30] sm:$0xff] %vm468, %v1861
      %1878 = vst.msk [vmem:[%s445 + $0x38] sm:$0xff] %vm468, %v1862
      %1879 = vst.msk [vmem:[%s445 + $0x40] sm:$0xff] %vm468, %v1863
      %1880 = vst.msk [vmem:[%s445 + $0x48] sm:$0xff] %vm468, %v1864
      %1881 = vst.msk [vmem:[%s445 + $0x50] sm:$0xff] %vm468, %v1865
      %1882 = vst.msk [vmem:[%s445 + $0x58] sm:$0xff] %vm468, %v1866
      %1883 = vst.msk [vmem:[%s445 + $0x60] sm:$0xff] %vm468, %v1867
      %1884 = vst.msk [vmem:[%s445 + $0x68] sm:$0xff] %vm468, %v1868
      %1885 = vst.msk [vmem:[%s445 + $0x70] sm:$0xff] %vm468, %v1869
      %1886 = vst.msk [vmem:[%s445 + $0x78] sm:$0xff] %vm468, %v1870
      %s1887 = smul.u32 8, %s23
      %p1888 = scmp.lt.s32.totalorder %s22, 1
      %s1889 = scalar_select %p1888, %s22, 1
      %p1890 = scmp.lt.s32.totalorder %s1887, 15
      %s1891 = scalar_select %p1890, %s1887, 15
      %s1892 = smul.addr %s1891, 2
      %s1893 = smul.addr %s1889, 32
      %s1894 = sadd.s32 %s1892, %s1893
      %s1895 = smul.addr %s1894, 8
      %s1896 = scalar_lea.vmem %s7, %s1895
      // Predicated region
      $region49: #{tpu_custom_call.1} parent=47 // pred_check
        %p1897 = pneg %p234
      $region50: #{tpu_custom_call.1} parent=47 // pred_check_branch
        %1899 = sbr.rel (%p1897) target = $region52
      $region51: #{tpu_custom_call.1} parent=47 // pred_region
        %s1900 = smul.u32 8, %s23
      $region52: #{tpu_custom_call.1} parent=47 // pred_fallthru
        _
    $region48: #{tpu_custom_call.1} parent=5 // pred_fallthru
      _
    %p1901 = scmp.le.s32.totalorder 2, %s13
    // Predicated region
    $region53: #{tpu_custom_call.1} parent=5 // pred_check
      %p1902 = pneg %p1901
    $region54: #{tpu_custom_call.1} parent=5 // pred_check_branch
      %1904 = sbr.rel (%p1902) target = $region56
    $region55: #{tpu_custom_call.1} parent=5 // pred_region
      %s1905 = ssub.s32 %s13, 2
      // Predicated region
      $region57: #{tpu_custom_call.1} parent=55 // pred_check
        %p1906 = pneg %p240
      $region58: #{tpu_custom_call.1} parent=55 // pred_check_branch
        %1908 = sbr.rel (%p1906) target = $region60
      $region59: #{tpu_custom_call.1} parent=55 // pred_region
        %s1909 = smul.u32 8, %s25
        %p1910 = scmp.lt.s32.totalorder %s24, 1
        %s1911 = scalar_select %p1910, %s24, 1
        %p1912 = scmp.lt.s32.totalorder %s1909, 15
        %s1913 = scalar_select %p1912, %s1909, 15
        %s1914 = smul.addr %s1913, 2
        %s1915 = smul.addr %s1911, 32
        %s1916 = sadd.s32 %s1914, %s1915
        %s1917 = smul.addr %s1916, 8
        %s1918 = scalar_lea.vmem %s7, %s1917
      $region60: #{tpu_custom_call.1} parent=55 // pred_fallthru
        _
    $region56: #{tpu_custom_call.1} parent=5 // pred_fallthru
      _
  $region6: #{tpu_custom_call.1} parent=0 // loop_footer
    %s17 = sadd.s32 1, %s13
  $region7: #{tpu_custom_call.1} parent=0 // loop_footer_branch
    %12 = sbr.rel target = $region3
  $region8: #{tpu_custom_call.1} parent=0 // loop_exit
    _

</llo_original>
